<compile_context>
chip_gen: v7x
topology: tpu7x:2x2x1
jax: 0.10.0
libtpu: 0.0.40
codegen_flags: <defaults>
</compile_context>

<pallas_src>
import math

import jax
import jax.numpy as jnp
import numpy as np
from jax.experimental import pallas as pl
from jax.experimental.pallas import tpu as pltpu


# ----------------------------------------------------------------------------
# Pallas kernel: one (batch, query-row-tile) block per grid step.
# ----------------------------------------------------------------------------
def gtv2_head_kernel(x_ref, e_ref, mcol_ref, mrow_ref,
                     wn_ref, we_ref, wg_ref,
                     bn_ref, be_ref, bm_ref,
                     xo_ref, eo_ref,
                     xn_sc):
    f32 = jnp.float32
    bf16 = jnp.bfloat16

    T = mcol_ref.shape[0]            # query rows in this tile
    N = x_ref.shape[0]               # total nodes
    D = wg_ref.shape[1]              # head_dim
    scale = 1.0 / math.sqrt(D)

    t_idx = pl.program_id(1)

    # ---- node projections (all nodes) computed once per batch into scratch ----
    @pl.when(t_idx == 0)
    def _():
        xn_sc[...] = (jnp.dot(x_ref[...], wn_ref[...],
                              preferred_element_type=f32) + bn_ref[...])

    row0 = pl.multiple_of(t_idx * T, T)
    xn_q = xn_sc[pl.ds(row0, T), :]          # [T, 6D] query-side rows (this tile)
    xn_k = xn_sc[...]                        # [N, 6D] key-side rows (all nodes)

    q_c = xn_q[:, 0:D]                       # cross-att query
    src = xn_q[:, D:2 * D]                   # edge-update source proj
    q_s = xn_q[:, 2 * D:3 * D]               # self-att query
    dst = xn_k[:, 3 * D:4 * D]               # edge-update dest proj
    k_s = xn_k[:, 4 * D:5 * D]               # self-att key
    v_s = xn_k[:, 5 * D:6 * D]               # self-att value

    # ---- edge projection for this row tile (dominant matmul) ----
    ep = (jnp.dot(e_ref[...], we_ref[...], preferred_element_type=f32)
          + be_ref[...])                                           # [T*N, 3D]
    kc3 = ep[:, 0:D].reshape(T, N, D)        # cross-att key   (leading-dim split)
    vc3 = ep[:, D:2 * D].reshape(T, N, D)    # cross-att value
    ep3 = ep[:, 2 * D:3 * D].reshape(T, N, D)  # edge residual proj

    mcol = mcol_ref[...]                     # [T, 1] query-node mask (this tile)
    mrow = mrow_ref[...]                     # [1, N] key-node mask
    key_valid = mrow > 0.0
    bm = bm_ref[...]                         # [2, D] (row0: edge-bias vec, row1: gate bias)

    # ---- cross attention: edge -> node (x_cross), batched MXU contractions ----
    s_c = jnp.einsum('tqd,tnd->tqn', q_c[:, None, :].astype(bf16),
                     kc3.astype(bf16), preferred_element_type=f32) * scale
    s_c = jnp.where(key_valid[None, :, :], s_c, -1e9)
    s_c = s_c - jnp.max(s_c, axis=-1, keepdims=True)
    p_c = jnp.exp(s_c)
    p_c = p_c * pl.reciprocal(jnp.sum(p_c, axis=-1, keepdims=True), approx=True)
    xc3 = jnp.einsum('tqn,tnd->tqd', p_c.astype(bf16), vc3.astype(bf16),
                     preferred_element_type=f32)                   # [T, 1, D]
    x_cross = jnp.sum(xc3, axis=1)                                 # [T, D]

    # ---- cross attention: node -> edge (e update) ----
    e_new = src[:, None, :] * dst[None, :, :] + ep3                # [T, N, D]
    e_new = e_new * (mcol[:, :, None] * mrow[:, :, None])
    eo_ref[...] = e_new.reshape(T * N, D)    # leading-dim merge (layout trivial)

    # ---- self attention: node -> node, logits biased by updated edges ----
    ebias = jnp.sum(e_new * bm[0:1, :][None, :, :], axis=-1)       # [T, N]
    s_s = jax.lax.dot_general(q_s.astype(bf16), k_s.astype(bf16),
                              (((1,), (1,)), ((), ())),
                              preferred_element_type=f32) * scale + ebias
    s_s = jnp.where(key_valid, s_s, -1e9)
    s_s = s_s - jnp.max(s_s, axis=-1, keepdims=True)
    p_s = jnp.exp(s_s)
    p_s = p_s * pl.reciprocal(jnp.sum(p_s, axis=-1, keepdims=True), approx=True)
    x_self = jnp.dot(p_s.astype(bf16), v_s.astype(bf16),
                     preferred_element_type=f32)                   # [T, D]

    # ---- gated integration (no concat: Wg split into two [D,D] halves) ----
    wg = wg_ref[...]
    g = jax.nn.sigmoid(
        jnp.dot(x_cross.astype(bf16), wg[0:D, :], preferred_element_type=f32)
        + jnp.dot(x_self.astype(bf16), wg[D:2 * D, :], preferred_element_type=f32)
        + bm[1:2, :])
    xo_ref[...] = g * x_cross + (1.0 - g) * x_self


# ----------------------------------------------------------------------------
# Wrapper: bf16 casts, reshapes, row-tiled grid over (batch, row tiles)
# ----------------------------------------------------------------------------
def attention_head_gtv2(x, e, node_mask, params, tile_rows=None,
                        vmem_limit_bytes=None):
    B, N, H = x.shape
    D = params["Wg"].shape[1]
    bf16 = jnp.bfloat16

    if tile_rows is None:
        tile_rows = 8 if (N >= 8 and N % 8 == 0) else N
    T = tile_rows
    assert N % T == 0 and (T % 8 == 0 or T == N)

    e_flat = e.reshape(B, N * N, H)
    mcol = node_mask.astype(jnp.float32).reshape(B, N, 1)
    mrow = node_mask.astype(jnp.float32).reshape(B, 1, N)

    # bf16 for every MXU operand (f32 accumulation inside the kernel).
    x_bf = x.astype(bf16)
    e_bf = e_flat.astype(bf16)
    wn = params["W_node"].astype(bf16)
    we = params["W_e"].astype(bf16)
    wg = params["Wg"].astype(bf16)

    # NOTE: for large N, raise vmem_limit_bytes (~48-56 MiB on v7x, up to
    # ~100 MiB on v5e/v6e) and enlarge tile_rows accordingly.
    cp_kwargs = dict(dimension_semantics=("parallel", "arbitrary"))
    if vmem_limit_bytes is not None:
        cp_kwargs["vmem_limit_bytes"] = vmem_limit_bytes

    x_out, e_out = pl.pallas_call(
        gtv2_head_kernel,
        out_shape=(
            jax.ShapeDtypeStruct((B, N, D), jnp.float32),
            jax.ShapeDtypeStruct((B, N * N, D), jnp.float32),
        ),
        grid_spec=pltpu.PrefetchScalarGridSpec(
            num_scalar_prefetch=0,
            grid=(B, N // T),
            in_specs=[
                pl.BlockSpec((None, N, H), lambda b, t: (b, 0, 0)),      # x (all nodes)
                pl.BlockSpec((None, T * N, H), lambda b, t: (b, t, 0)),  # e row tile
                pl.BlockSpec((None, T, 1), lambda b, t: (b, t, 0)),      # query mask tile
                pl.BlockSpec((None, 1, N), lambda b, t: (b, 0, 0)),      # key mask
                pl.BlockSpec((H, 6 * D), lambda b, t: (0, 0)),           # W_node (fused)
                pl.BlockSpec((H, 3 * D), lambda b, t: (0, 0)),           # W_e (fused)
                pl.BlockSpec((2 * D, D), lambda b, t: (0, 0)),           # Wg
                pl.BlockSpec((1, 6 * D), lambda b, t: (0, 0)),           # node proj bias
                pl.BlockSpec((1, 3 * D), lambda b, t: (0, 0)),           # edge proj bias
                pl.BlockSpec((2, D), lambda b, t: (0, 0)),               # b9 / gate bias
            ],
            out_specs=[
                pl.BlockSpec((None, T, D), lambda b, t: (b, t, 0)),
                pl.BlockSpec((None, T * N, D), lambda b, t: (b, t, 0)),
            ],
            scratch_shapes=[pltpu.VMEM((N, 6 * D), jnp.float32)],        # node projections
        ),
        compiler_params=pltpu.CompilerParams(**cp_kwargs),
    )(x_bf, e_bf, mcol, mrow, wn, we, wg,
      params["b_node"], params["b_e"], params["b_misc"])

    return x_out, e_out.reshape(B, N, N, D)


# ----------------------------------------------------------------------------
# Pure-JAX reference (identical math incl. bf16 matmul casts) for verification
# ----------------------------------------------------------------------------
def reference(x, e, node_mask, params):
    B, N, H = x.shape
    D = params["Wg"].shape[1]
    f32, bf16 = jnp.float32, jnp.bfloat16
    scale = 1.0 / math.sqrt(D)
    mrow = node_mask.astype(f32).reshape(B, 1, N)
    mcol = node_mask.astype(f32).reshape(B, N, 1)

    def mm(a, w):
        return jnp.einsum('...h,hd->...d', a.astype(bf16), w.astype(bf16),
                          preferred_element_type=f32)

    xn = mm(x, params["W_node"]) + params["b_node"][0]
    ep = mm(e, params["W_e"]) + params["b_e"][0]
    q_c, src, q_s = xn[..., 0:D], xn[..., D:2 * D], xn[..., 2 * D:3 * D]
    dst, k_s, v_s = xn[..., 3 * D:4 * D], xn[..., 4 * D:5 * D], xn[..., 5 * D:6 * D]
    k_c, v_c, e_p = ep[..., 0:D], ep[..., D:2 * D], ep[..., 2 * D:3 * D]

    # edge -> node
    s_c = jnp.einsum('bid,bijd->bij', q_c.astype(bf16), k_c.astype(bf16),
                     preferred_element_type=f32) * scale
    s_c = jnp.where(mrow > 0.0, s_c, -1e9)
    s_c = s_c - jnp.max(s_c, axis=-1, keepdims=True)
    p_c = jnp.exp(s_c)
    p_c = p_c / jnp.sum(p_c, axis=-1, keepdims=True)
    x_cross = jnp.einsum('bij,bijd->bid', p_c.astype(bf16), v_c.astype(bf16),
                         preferred_element_type=f32)

    # node -> edge
    e_new = src[:, :, None, :] * dst[:, None, :, :] + e_p
    e_new = e_new * (mcol[:, :, :, None] * mrow[:, :, :, None])

    # node -> node (edge-biased)
    ebias = jnp.sum(e_new * params["b_misc"][0].reshape(1, 1, 1, D), axis=-1)
    s_s = jnp.einsum('bid,bjd->bij', q_s.astype(bf16), k_s.astype(bf16),
                     preferred_element_type=f32) * scale + ebias
    s_s = jnp.where(mrow > 0.0, s_s, -1e9)
    s_s = s_s - jnp.max(s_s, axis=-1, keepdims=True)
    p_s = jnp.exp(s_s)
    p_s = p_s / jnp.sum(p_s, axis=-1, keepdims=True)
    x_self = jnp.einsum('bij,bjd->bid', p_s.astype(bf16), v_s.astype(bf16),
                        preferred_element_type=f32)

    Wg = params["Wg"]
    g = jax.nn.sigmoid(
        jnp.einsum('bnd,de->bne', x_cross.astype(bf16), Wg[0:D].astype(bf16),
                   preferred_element_type=f32)
        + jnp.einsum('bnd,de->bne', x_self.astype(bf16), Wg[D:].astype(bf16),
                     preferred_element_type=f32)
        + params["b_misc"][1])
    x_out = g * x_cross + (1.0 - g) * x_self
    return x_out, e_new


# ----------------------------------------------------------------------------
# Deterministic synthetic parameters (fused layouts)
# ----------------------------------------------------------------------------
def init_params(key, H, D):
    ks = jax.random.split(key, 6)
    s = 0.1
    return {
        "W_node": jax.random.normal(ks[0], (H, 6 * D), jnp.float32) * s,  # [q_c|src|q_s|dst|k_s|v_s]
        "W_e":    jax.random.normal(ks[1], (H, 3 * D), jnp.float32) * s,  # [k_c|v_c|e_p]
        "Wg":     jax.random.normal(ks[2], (2 * D, D), jnp.float32) * s,  # gate weights
        "b_node": jax.random.normal(ks[3], (1, 6 * D), jnp.float32) * s,
        "b_e":    jax.random.normal(ks[4], (1, 3 * D), jnp.float32) * s,
        "b_misc": jax.random.normal(ks[5], (2, D), jnp.float32) * s,      # [b9; gate bias]
    }


if __name__ == "__main__":
    key = jax.random.PRNGKey(0)
    B, N, H, D = 2, 16, 32, 16          # batch, nodes, hidden_dim, head_dim
    TILE = 8                            # query rows per grid step

    kx, ke, kp = jax.random.split(key, 3)
    x = jax.random.normal(kx, (B, N, H), jnp.float32)
    e = jax.random.normal(ke, (B, N, N, H), jnp.float32)
    node_mask = jnp.ones((B, N), jnp.float32).at[1, N - 1].set(0.0)
    params = init_params(kp, H, D)

    x_out, e_out = attention_head_gtv2(x, e, node_mask, params, tile_rows=TILE)
    jax.block_until_ready((x_out, e_out))

    x_ref, e_ref = reference(x, e, node_mask, params)
    assert np.allclose(np.asarray(x_out), np.asarray(x_ref),
                       atol=2e-2, rtol=2e-2), "x mismatch vs reference"
    assert np.allclose(np.asarray(e_out), np.asarray(e_ref),
                       atol=2e-2, rtol=2e-2), "e mismatch vs reference"

    print("KERNEL_OK")
</pallas_src>

<mosaic_0001>
module attributes {stable_mosaic.version = 11 : i64} {
  func.func @gtv2_head_kernel(%arg0: i32, %arg1: i32, %arg2: memref<1x16x32xbf16, #tpu.memory_space<vmem>>, %arg3: memref<1x128x32xbf16, #tpu.memory_space<vmem>>, %arg4: memref<1x8x1xf32, #tpu.memory_space<vmem>>, %arg5: memref<1x1x16xf32, #tpu.memory_space<vmem>>, %arg6: memref<32x96xbf16, #tpu.memory_space<vmem>>, %arg7: memref<32x48xbf16, #tpu.memory_space<vmem>>, %arg8: memref<32x16xbf16, #tpu.memory_space<vmem>>, %arg9: memref<1x96xf32, #tpu.memory_space<vmem>>, %arg10: memref<1x48xf32, #tpu.memory_space<vmem>>, %arg11: memref<2x16xf32, #tpu.memory_space<vmem>>, %arg12: memref<1x8x16xf32, #tpu.memory_space<vmem>>, %arg13: memref<1x128x16xf32, #tpu.memory_space<vmem>>, %arg14: memref<16x96xf32, #tpu.memory_space<vmem>>) attributes {dimension_semantics = [#tpu.dimension_semantics<parallel>, #tpu.dimension_semantics<arbitrary>], iteration_bounds = array<i64: 2, 2>, scalar_prefetch = 0 : i64, scratch_operands = 1 : i64, tpu.core_type = #tpu.core_type<tc>, window_params = [{transform_indices = @transform_0, window_bounds = array<i64: 1, 16, 32>}, {transform_indices = @transform_1, window_bounds = array<i64: 1, 128, 32>}, {transform_indices = @transform_2, window_bounds = array<i64: 1, 8, 1>}, {transform_indices = @transform_3, window_bounds = array<i64: 1, 1, 16>}, {pipeline_mode = #tpu.pipeline_mode<synchronous>, transform_indices = @transform_4, window_bounds = array<i64: 32, 96>}, {pipeline_mode = #tpu.pipeline_mode<synchronous>, transform_indices = @transform_5, window_bounds = array<i64: 32, 48>}, {pipeline_mode = #tpu.pipeline_mode<synchronous>, transform_indices = @transform_6, window_bounds = array<i64: 32, 16>}, {pipeline_mode = #tpu.pipeline_mode<synchronous>, transform_indices = @transform_7, window_bounds = array<i64: 1, 96>}, {pipeline_mode = #tpu.pipeline_mode<synchronous>, transform_indices = @transform_8, window_bounds = array<i64: 1, 48>}, {pipeline_mode = #tpu.pipeline_mode<synchronous>, transform_indices = @transform_9, window_bounds = array<i64: 2, 16>}, {transform_indices = @transform_10, window_bounds = array<i64: 1, 8, 16>}, {transform_indices = @transform_11, window_bounds = array<i64: 1, 128, 16>}]} {
    %c0_i32 = arith.constant 0 : i32
    %0 = arith.cmpi eq, %arg1, %c0_i32 : i32
    %1 = arith.extui %0 : i1 to i32
    %c0_i32_0 = arith.constant 0 : i32
    %2 = arith.cmpi ne, %1, %c0_i32_0 : i32
    scf.if %2 {
      %c0_45 = arith.constant 0 : index
      %c0_46 = arith.constant 0 : index
      %c0_47 = arith.constant 0 : index
      %128 = vector.load %arg2[%c0_45, %c0_46, %c0_47] : memref<1x16x32xbf16, #tpu.memory_space<vmem>>, vector<1x16x32xbf16>
      %129 = vector.shape_cast %128 : vector<1x16x32xbf16> to vector<16x32xbf16>
      %c0_48 = arith.constant 0 : index
      %c0_49 = arith.constant 0 : index
      %130 = vector.load %arg6[%c0_48, %c0_49] : memref<32x96xbf16, #tpu.memory_space<vmem>>, vector<32x96xbf16>
      %cst_50 = arith.constant dense<0.000000e+00> : vector<16x96xf32>
      %131 = tpu.matmul %129, %130, %cst_50 {dimension_numbers = #tpu.dot_dimension_numbers<[1], [0], [0], [1], [0, 0, 1, 1], [], []>} : vector<16x32xbf16>, vector<32x96xbf16>, vector<16x96xf32> -> vector<16x96xf32>
      %c0_51 = arith.constant 0 : index
      %c0_52 = arith.constant 0 : index
      %132 = vector.load %arg9[%c0_51, %c0_52] : memref<1x96xf32, #tpu.memory_space<vmem>>, vector<1x96xf32>
      %133 = vector.broadcast %132 : vector<1x96xf32> to vector<16x96xf32>
      %134 = arith.addf %131, %133 : vector<16x96xf32>
      %c0_53 = arith.constant 0 : index
      %c0_54 = arith.constant 0 : index
      %135 = vector.load %arg14[%c0_53, %c0_54] : memref<16x96xf32, #tpu.memory_space<vmem>>, vector<16x96xf32>
      tpu.vector_store %arg14[%c0_53, %c0_54], %134 {strides = array<i32>} : memref<16x96xf32, #tpu.memory_space<vmem>>, vector<16x96xf32>,
    } else {
    }
    %c8_i32 = arith.constant 8 : i32
    %3 = arith.muli %arg1, %c8_i32 : i32
    %4 = tpu.assume_multiple %3, 8 : i32
    %5 = arith.index_cast %4 : i32 to index
    %c0 = arith.constant 0 : index
    %6 = vector.load %arg14[%5, %c0] : memref<16x96xf32, #tpu.memory_space<vmem>>, vector<8x96xf32>
    %c0_1 = arith.constant 0 : index
    %c0_2 = arith.constant 0 : index
    %7 = vector.load %arg14[%c0_1, %c0_2] : memref<16x96xf32, #tpu.memory_space<vmem>>, vector<16x96xf32>
    %8 = vector.extract_strided_slice %6 {offsets = [0, 0], sizes = [8, 16], strides = [1, 1]} : vector<8x96xf32> to vector<8x16xf32>
    %9 = vector.extract_strided_slice %6 {offsets = [0, 16], sizes = [8, 16], strides = [1, 1]} : vector<8x96xf32> to vector<8x16xf32>
    %10 = vector.extract_strided_slice %6 {offsets = [0, 32], sizes = [8, 16], strides = [1, 1]} : vector<8x96xf32> to vector<8x16xf32>
    %11 = vector.extract_strided_slice %7 {offsets = [0, 48], sizes = [16, 16], strides = [1, 1]} : vector<16x96xf32> to vector<16x16xf32>
    %12 = vector.extract_strided_slice %7 {offsets = [0, 64], sizes = [16, 16], strides = [1, 1]} : vector<16x96xf32> to vector<16x16xf32>
    %13 = vector.extract_strided_slice %7 {offsets = [0, 80], sizes = [16, 16], strides = [1, 1]} : vector<16x96xf32> to vector<16x16xf32>
    %c0_3 = arith.constant 0 : index
    %c0_4 = arith.constant 0 : index
    %c0_5 = arith.constant 0 : index
    %14 = vector.load %arg3[%c0_3, %c0_4, %c0_5] : memref<1x128x32xbf16, #tpu.memory_space<vmem>>, vector<1x128x32xbf16>
    %15 = vector.shape_cast %14 : vector<1x128x32xbf16> to vector<128x32xbf16>
    %c0_6 = arith.constant 0 : index
    %c0_7 = arith.constant 0 : index
    %16 = vector.load %arg7[%c0_6, %c0_7] : memref<32x48xbf16, #tpu.memory_space<vmem>>, vector<32x48xbf16>
    %cst = arith.constant dense<0.000000e+00> : vector<128x48xf32>
    %17 = tpu.matmul %15, %16, %cst {dimension_numbers = #tpu.dot_dimension_numbers<[1], [0], [0], [1], [0, 0, 1, 1], [], []>} : vector<128x32xbf16>, vector<32x48xbf16>, vector<128x48xf32> -> vector<128x48xf32>
    %c0_8 = arith.constant 0 : index
    %c0_9 = arith.constant 0 : index
    %18 = vector.load %arg10[%c0_8, %c0_9] : memref<1x48xf32, #tpu.memory_space<vmem>>, vector<1x48xf32>
    %19 = vector.broadcast %18 : vector<1x48xf32> to vector<128x48xf32>
    %20 = arith.addf %17, %19 : vector<128x48xf32>
    %21 = vector.extract_strided_slice %20 {offsets = [0, 0], sizes = [128, 16], strides = [1, 1]} : vector<128x48xf32> to vector<128x16xf32>
    %22 = vector.shape_cast %21 : vector<128x16xf32> to vector<8x16x16xf32>
    %23 = vector.extract_strided_slice %20 {offsets = [0, 16], sizes = [128, 16], strides = [1, 1]} : vector<128x48xf32> to vector<128x16xf32>
    %24 = vector.shape_cast %23 : vector<128x16xf32> to vector<8x16x16xf32>
    %25 = vector.extract_strided_slice %20 {offsets = [0, 32], sizes = [128, 16], strides = [1, 1]} : vector<128x48xf32> to vector<128x16xf32>
    %26 = vector.shape_cast %25 : vector<128x16xf32> to vector<8x16x16xf32>
    %c0_10 = arith.constant 0 : index
    %c0_11 = arith.constant 0 : index
    %c0_12 = arith.constant 0 : index
    %27 = vector.load %arg4[%c0_10, %c0_11, %c0_12] : memref<1x8x1xf32, #tpu.memory_space<vmem>>, vector<1x8x1xf32>
    %28 = vector.shape_cast %27 : vector<1x8x1xf32> to vector<8x1xf32>
    %c0_13 = arith.constant 0 : index
    %c0_14 = arith.constant 0 : index
    %c0_15 = arith.constant 0 : index
    %29 = vector.load %arg5[%c0_13, %c0_14, %c0_15] : memref<1x1x16xf32, #tpu.memory_space<vmem>>, vector<1x1x16xf32>
    %30 = vector.shape_cast %29 : vector<1x1x16xf32> to vector<1x16xf32>
    %cst_16 = arith.constant 0.000000e+00 : f32
    %31 = vector.broadcast %cst_16 : f32 to vector<1x16xf32>
    %32 = arith.cmpf ogt, %30, %31 : vector<1x16xf32>
    %c0_17 = arith.constant 0 : index
    %c0_18 = arith.constant 0 : index
    %33 = vector.load %arg11[%c0_17, %c0_18] : memref<2x16xf32, #tpu.memory_space<vmem>>, vector<2x16xf32>
    %34 = vector.shape_cast %8 : vector<8x16xf32> to vector<8x1x16xf32>
    %35 = arith.truncf %34 : vector<8x1x16xf32> to vector<8x1x16xbf16>
    %36 = arith.truncf %22 : vector<8x16x16xf32> to vector<8x16x16xbf16>
    "tpu.trace_start"() <{level = 10 : i32, message = "tqd,tnd->tqn"}> : () -> ()
    %cst_19 = arith.constant dense<0.000000e+00> : vector<8x1x16xf32>
    %37 = tpu.matmul %35, %36, %cst_19 {dimension_numbers = #tpu.dot_dimension_numbers<[2], [2], [1], [1], [0, 0, 0, 1, 1, 1], [0], [0]>} : vector<8x1x16xbf16>, vector<8x16x16xbf16>, vector<8x1x16xf32> -> vector<8x1x16xf32>
    "tpu.trace_stop"() : () -> ()
    %cst_20 = arith.constant 2.500000e-01 : f32
    %38 = vector.broadcast %cst_20 : f32 to vector<8x1x16xf32>
    %39 = arith.mulf %37, %38 : vector<8x1x16xf32>
    %40 = vector.shape_cast %32 : vector<1x16xi1> to vector<1x1x16xi1>
    %cst_21 = arith.constant -1.000000e+09 : f32
    %41 = vector.shape_cast %40 : vector<1x1x16xi1> to vector<1x1x16xi1>
    %42 = vector.broadcast %41 : vector<1x1x16xi1> to vector<8x1x16xi1>
    %43 = vector.broadcast %cst_21 : f32 to vector<8x1x16xf32>
    %44 = arith.select %42, %39, %43 : vector<8x1x16xi1>, vector<8x1x16xf32>
    %cst_22 = arith.constant dense<0xFF800000> : vector<8x1xf32>
    %45 = vector.multi_reduction <maximumf>, %44, %cst_22 [2] : vector<8x1x16xf32> to vector<8x1xf32>
    %46 = vector.shape_cast %45 : vector<8x1xf32> to vector<8x1x1xf32>
    %47 = vector.broadcast %46 : vector<8x1x1xf32> to vector<8x1x16xf32>
    %48 = arith.subf %44, %47 : vector<8x1x16xf32>
    %49 = math.exp %48 : vector<8x1x16xf32>
    %cst_23 = arith.constant dense<0.000000e+00> : vector<8x1xf32>
    %50 = vector.multi_reduction <add>, %49, %cst_23 [2] : vector<8x1x16xf32> to vector<8x1xf32>
    %51 = vector.shape_cast %50 : vector<8x1xf32> to vector<8x1x1xf32>
    %52 = tpu.reciprocal %51 {approx = true} : vector<8x1x1xf32> -> vector<8x1x1xf32>
    %53 = vector.broadcast %52 : vector<8x1x1xf32> to vector<8x1x16xf32>
    %54 = arith.mulf %49, %53 : vector<8x1x16xf32>
    %55 = arith.truncf %54 : vector<8x1x16xf32> to vector<8x1x16xbf16>
    %56 = arith.truncf %24 : vector<8x16x16xf32> to vector<8x16x16xbf16>
    "tpu.trace_start"() <{level = 10 : i32, message = "tqn,tnd->tqd"}> : () -> ()
    %cst_24 = arith.constant dense<0.000000e+00> : vector<8x1x16xf32>
    %57 = tpu.matmul %55, %56, %cst_24 {dimension_numbers = #tpu.dot_dimension_numbers<[2], [1], [1], [2], [0, 0, 0, 1, 1, 2], [0], [0]>} : vector<8x1x16xbf16>, vector<8x16x16xbf16>, vector<8x1x16xf32> -> vector<8x1x16xf32>
    "tpu.trace_stop"() : () -> ()
    %cst_25 = arith.constant dense<0.000000e+00> : vector<8x16xf32>
    %58 = vector.multi_reduction <add>, %57, %cst_25 [1] : vector<8x1x16xf32> to vector<8x16xf32>
    %59 = vector.shape_cast %9 : vector<8x16xf32> to vector<8x1x16xf32>
    %60 = vector.shape_cast %11 : vector<16x16xf32> to vector<1x16x16xf32>
    %61 = vector.broadcast %59 : vector<8x1x16xf32> to vector<8x16x16xf32>
    %62 = vector.broadcast %60 : vector<1x16x16xf32> to vector<8x16x16xf32>
    %63 = arith.mulf %61, %62 : vector<8x16x16xf32>
    %64 = arith.addf %63, %26 : vector<8x16x16xf32>
    %65 = vector.shape_cast %28 : vector<8x1xf32> to vector<8x1x1xf32>
    %66 = vector.shape_cast %30 : vector<1x16xf32> to vector<1x16x1xf32>
    %67 = vector.broadcast %65 : vector<8x1x1xf32> to vector<8x16x1xf32>
    %68 = vector.broadcast %66 : vector<1x16x1xf32> to vector<8x16x1xf32>
    %69 = arith.mulf %67, %68 : vector<8x16x1xf32>
    %70 = vector.broadcast %69 : vector<8x16x1xf32> to vector<8x16x16xf32>
    %71 = arith.mulf %64, %70 : vector<8x16x16xf32>
    %72 = vector.shape_cast %71 : vector<8x16x16xf32> to vector<128x16xf32>
    %c0_26 = arith.constant 0 : index
    %c0_27 = arith.constant 0 : index
    %c0_28 = arith.constant 0 : index
    %73 = vector.load %arg13[%c0_26, %c0_27, %c0_28] : memref<1x128x16xf32, #tpu.memory_space<vmem>>, vector<1x128x16xf32>
    %74 = vector.shape_cast %73 : vector<1x128x16xf32> to vector<128x16xf32>
    %75 = vector.shape_cast %72 : vector<128x16xf32> to vector<1x128x16xf32>
    tpu.vector_store %arg13[%c0_26, %c0_27, %c0_28], %75 {strides = array<i32>} : memref<1x128x16xf32, #tpu.memory_space<vmem>>, vector<1x128x16xf32>,
    %76 = vector.extract_strided_slice %33 {offsets = [0, 0], sizes = [1, 16], strides = [1, 1]} : vector<2x16xf32> to vector<1x16xf32>
    %77 = vector.shape_cast %76 : vector<1x16xf32> to vector<1x1x16xf32>
    %78 = vector.broadcast %77 : vector<1x1x16xf32> to vector<8x16x16xf32>
    %79 = arith.mulf %71, %78 : vector<8x16x16xf32>
    %cst_29 = arith.constant dense<0.000000e+00> : vector<8x16xf32>
    %80 = vector.multi_reduction <add>, %79, %cst_29 [2] : vector<8x16x16xf32> to vector<8x16xf32>
    %81 = arith.truncf %10 : vector<8x16xf32> to vector<8x16xbf16>
    %82 = arith.truncf %12 : vector<16x16xf32> to vector<16x16xbf16>
    %cst_30 = arith.constant dense<0.000000e+00> : vector<8x16xf32>
    %83 = tpu.matmul %81, %82, %cst_30 {dimension_numbers = #tpu.dot_dimension_numbers<[1], [1], [0], [0], [0, 0, 1, 0], [], []>} : vector<8x16xbf16>, vector<16x16xbf16>, vector<8x16xf32> -> vector<8x16xf32>
    %cst_31 = arith.constant 2.500000e-01 : f32
    %84 = vector.broadcast %cst_31 : f32 to vector<8x16xf32>
    %85 = arith.mulf %83, %84 : vector<8x16xf32>
    %86 = arith.addf %85, %80 : vector<8x16xf32>
    %cst_32 = arith.constant -1.000000e+09 : f32
    %87 = vector.shape_cast %32 : vector<1x16xi1> to vector<1x16xi1>
    %88 = vector.broadcast %87 : vector<1x16xi1> to vector<8x16xi1>
    %89 = vector.broadcast %cst_32 : f32 to vector<8x16xf32>
    %90 = arith.select %88, %86, %89 : vector<8x16xi1>, vector<8x16xf32>
    %cst_33 = arith.constant dense<0xFF800000> : vector<8xf32>
    %91 = vector.multi_reduction <maximumf>, %90, %cst_33 [1] : vector<8x16xf32> to vector<8xf32>
    %92 = vector.shape_cast %91 : vector<8xf32> to vector<8x1xf32>
    %93 = vector.broadcast %92 : vector<8x1xf32> to vector<8x16xf32>
    %94 = arith.subf %90, %93 : vector<8x16xf32>
    %95 = math.exp %94 : vector<8x16xf32>
    %cst_34 = arith.constant dense<0.000000e+00> : vector<8xf32>
    %96 = vector.multi_reduction <add>, %95, %cst_34 [1] : vector<8x16xf32> to vector<8xf32>
    %97 = vector.shape_cast %96 : vector<8xf32> to vector<8x1xf32>
    %98 = tpu.reciprocal %97 {approx = true} : vector<8x1xf32> -> vector<8x1xf32>
    %99 = vector.broadcast %98 : vector<8x1xf32> to vector<8x16xf32>
    %100 = arith.mulf %95, %99 : vector<8x16xf32>
    %101 = arith.truncf %100 : vector<8x16xf32> to vector<8x16xbf16>
    %102 = arith.truncf %13 : vector<16x16xf32> to vector<16x16xbf16>
    %cst_35 = arith.constant dense<0.000000e+00> : vector<8x16xf32>
    %103 = tpu.matmul %101, %102, %cst_35 {dimension_numbers = #tpu.dot_dimension_numbers<[1], [0], [0], [1], [0, 0, 1, 1], [], []>} : vector<8x16xbf16>, vector<16x16xbf16>, vector<8x16xf32> -> vector<8x16xf32>
    %c0_36 = arith.constant 0 : index
    %c0_37 = arith.constant 0 : index
    %104 = vector.load %arg8[%c0_36, %c0_37] : memref<32x16xbf16, #tpu.memory_space<vmem>>, vector<32x16xbf16>
    %105 = arith.truncf %58 : vector<8x16xf32> to vector<8x16xbf16>
    %106 = vector.extract_strided_slice %104 {offsets = [0, 0], sizes = [16, 16], strides = [1, 1]} : vector<32x16xbf16> to vector<16x16xbf16>
    %cst_38 = arith.constant dense<0.000000e+00> : vector<8x16xf32>
    %107 = tpu.matmul %105, %106, %cst_38 {dimension_numbers = #tpu.dot_dimension_numbers<[1], [0], [0], [1], [0, 0, 1, 1], [], []>} : vector<8x16xbf16>, vector<16x16xbf16>, vector<8x16xf32> -> vector<8x16xf32>
    %108 = arith.truncf %103 : vector<8x16xf32> to vector<8x16xbf16>
    %109 = vector.extract_strided_slice %104 {offsets = [16, 0], sizes = [16, 16], strides = [1, 1]} : vector<32x16xbf16> to vector<16x16xbf16>
    %cst_39 = arith.constant dense<0.000000e+00> : vector<8x16xf32>
    %110 = tpu.matmul %108, %109, %cst_39 {dimension_numbers = #tpu.dot_dimension_numbers<[1], [0], [0], [1], [0, 0, 1, 1], [], []>} : vector<8x16xbf16>, vector<16x16xbf16>, vector<8x16xf32> -> vector<8x16xf32>
    %111 = arith.addf %107, %110 : vector<8x16xf32>
    %112 = vector.extract_strided_slice %33 {offsets = [1, 0], sizes = [1, 16], strides = [1, 1]} : vector<2x16xf32> to vector<1x16xf32>
    %113 = vector.broadcast %112 : vector<1x16xf32> to vector<8x16xf32>
    %114 = arith.addf %111, %113 : vector<8x16xf32>
    %115 = arith.negf %114 : vector<8x16xf32>
    %116 = math.exp %115 : vector<8x16xf32>
    %cst_40 = arith.constant 1.000000e+00 : f32
    %117 = vector.broadcast %cst_40 : f32 to vector<8x16xf32>
    %118 = arith.addf %117, %116 : vector<8x16xf32>
    %119 = arith.divf %117, %118 : vector<8x16xf32>
    %120 = arith.mulf %119, %58 : vector<8x16xf32>
    %cst_41 = arith.constant 1.000000e+00 : f32
    %121 = vector.broadcast %cst_41 : f32 to vector<8x16xf32>
    %122 = arith.subf %121, %119 : vector<8x16xf32>
    %123 = arith.mulf %122, %103 : vector<8x16xf32>
    %124 = arith.addf %120, %123 : vector<8x16xf32>
    %c0_42 = arith.constant 0 : index
    %c0_43 = arith.constant 0 : index
    %c0_44 = arith.constant 0 : index
    %125 = vector.load %arg12[%c0_42, %c0_43, %c0_44] : memref<1x8x16xf32, #tpu.memory_space<vmem>>, vector<1x8x16xf32>
    %126 = vector.shape_cast %125 : vector<1x8x16xf32> to vector<8x16xf32>
    %127 = vector.shape_cast %124 : vector<8x16xf32> to vector<1x8x16xf32>
    tpu.vector_store %arg12[%c0_42, %c0_43, %c0_44], %127 {strides = array<i32>} : memref<1x8x16xf32, #tpu.memory_space<vmem>>, vector<1x8x16xf32>,
    return
  }
  func.func @transform_0(%arg0: i32, %arg1: i32) -> (i32, i32, i32) {
    %c0_i32 = arith.constant 0 : i32
    %c0_i32_0 = arith.constant 0 : i32
    %c0_i32_1 = arith.constant 0 : i32
    return %arg0, %c0_i32, %c0_i32_0 : i32, i32, i32
  }
  func.func @transform_1(%arg0: i32, %arg1: i32) -> (i32, i32, i32) {
    %c0_i32 = arith.constant 0 : i32
    %c0_i32_0 = arith.constant 0 : i32
    return %arg0, %arg1, %c0_i32 : i32, i32, i32
  }
  func.func @transform_2(%arg0: i32, %arg1: i32) -> (i32, i32, i32) {
    %c0_i32 = arith.constant 0 : i32
    %c0_i32_0 = arith.constant 0 : i32
    return %arg0, %arg1, %c0_i32 : i32, i32, i32
  }
  func.func @transform_3(%arg0: i32, %arg1: i32) -> (i32, i32, i32) {
    %c0_i32 = arith.constant 0 : i32
    %c0_i32_0 = arith.constant 0 : i32
    %c0_i32_1 = arith.constant 0 : i32
    return %arg0, %c0_i32, %c0_i32_0 : i32, i32, i32
  }
  func.func @transform_4(%arg0: i32, %arg1: i32) -> (i32, i32) {
    %c0_i32 = arith.constant 0 : i32
    %c0_i32_0 = arith.constant 0 : i32
    %c0_i32_1 = arith.constant 0 : i32
    return %c0_i32, %c0_i32_0 : i32, i32
  }
  func.func @transform_5(%arg0: i32, %arg1: i32) -> (i32, i32) {
    %c0_i32 = arith.constant 0 : i32
    %c0_i32_0 = arith.constant 0 : i32
    %c0_i32_1 = arith.constant 0 : i32
    return %c0_i32, %c0_i32_0 : i32, i32
  }
  func.func @transform_6(%arg0: i32, %arg1: i32) -> (i32, i32) {
    %c0_i32 = arith.constant 0 : i32
    %c0_i32_0 = arith.constant 0 : i32
    %c0_i32_1 = arith.constant 0 : i32
    return %c0_i32, %c0_i32_0 : i32, i32
  }
  func.func @transform_7(%arg0: i32, %arg1: i32) -> (i32, i32) {
    %c0_i32 = arith.constant 0 : i32
    %c0_i32_0 = arith.constant 0 : i32
    %c0_i32_1 = arith.constant 0 : i32
    return %c0_i32, %c0_i32_0 : i32, i32
  }
  func.func @transform_8(%arg0: i32, %arg1: i32) -> (i32, i32) {
    %c0_i32 = arith.constant 0 : i32
    %c0_i32_0 = arith.constant 0 : i32
    %c0_i32_1 = arith.constant 0 : i32
    return %c0_i32, %c0_i32_0 : i32, i32
  }
  func.func @transform_9(%arg0: i32, %arg1: i32) -> (i32, i32) {
    %c0_i32 = arith.constant 0 : i32
    %c0_i32_0 = arith.constant 0 : i32
    %c0_i32_1 = arith.constant 0 : i32
    return %c0_i32, %c0_i32_0 : i32, i32
  }
  func.func @transform_10(%arg0: i32, %arg1: i32) -> (i32, i32, i32) {
    %c0_i32 = arith.constant 0 : i32
    %c0_i32_0 = arith.constant 0 : i32
    return %arg0, %arg1, %c0_i32 : i32, i32, i32
  }
  func.func @transform_11(%arg0: i32, %arg1: i32) -> (i32, i32, i32) {
    %c0_i32 = arith.constant 0 : i32
    %c0_i32_0 = arith.constant 0 : i32
    return %arg0, %arg1, %c0_i32 : i32, i32, i32
  }
}

</mosaic_0001>

<llo_original>
// kernel: tpu_custom_call.1
$region0: #{tpu_custom_call.1}
  #allocation0 [shape = 'u32[]', space=smem, size = 0x4, offset = 0x4, fixed_abs, tag = 'smem constant byte address 0x4 - core index']
  #allocation1 [shape = 'u32[144,128]{1,0:T(1,128)}', space=vmem, size = 0x12000, scoped, tag = 'internal scratch']
  #allocation2 [shape = 'f32[16,96]{1,0:T(8,128)}', space=vmem, size = 0x2000, scoped, tag = 'scratch operand']
  %s0 = inlined_call_operand.vmem [shape: bf16[2,16,32], index: 0, kind: input, shape index: {}]
  %s1 = inlined_call_operand.vmem [shape: bf16[2,256,32], index: 1, kind: input, shape index: {}]
  %s2 = inlined_call_operand.vmem [shape: f32[2,16,1], index: 2, kind: input, shape index: {}]
  %s3 = inlined_call_operand.vmem [shape: f32[2,1,16], index: 3, kind: input, shape index: {}]
  %s4 = inlined_call_operand.vmem [shape: bf16[32,96], index: 4, kind: input, shape index: {}]
  %s5 = inlined_call_operand.vmem [shape: bf16[32,48], index: 5, kind: input, shape index: {}]
  %s6 = inlined_call_operand.vmem [shape: bf16[32,16], index: 6, kind: input, shape index: {}]
  %s7 = inlined_call_operand.vmem [shape: f32[1,96], index: 7, kind: input, shape index: {}]
  %s8 = inlined_call_operand.vmem [shape: f32[1,48], index: 8, kind: input, shape index: {}]
  %s9 = inlined_call_operand.vmem [shape: f32[2,16], index: 9, kind: input, shape index: {}]
  %s10 = inlined_call_operand.hbm [shape: f32[2,16,16], index: 10, kind: output, shape index: {0}]
  %s11 = inlined_call_operand.vmem [shape: f32[2,256,16], index: 11, kind: output, shape index: {1}]
  %12 = xla_tuple %s10, %s11
  %s13 = sld [smem:[#allocation0]]
  $region85: #{tpu_custom_call.1} parent=0
    _
  %s15 = ssub.s32 1, %s13
  %s16 = scalar_select 0, %s15, %s13
  $region1: #{tpu_custom_call.1} parent=0
    #allocation3 [shape = 'u8[8192]{0}', space=vmem, size = 0x2000, scoped, tag = 'output window, operand 0']
    #allocation4 [shape = 's32[2]{0}', space=sflag, size = 0x8, scoped, tag = 'scoped memory for tpu_custom_call.1']
    %17 = vsyncpa [#allocation4], 0
    %s18 = scalar_lea.sflag [#allocation4], 1
    %19 = vsyncpa %s18, 0
    loop: start=0, step=1, limit=6
    $region2: #{tpu_custom_call.1} parent=1 // loop_pre_header
      _
    $region3: #{tpu_custom_call.1} parent=1 // loop_header
      %s21 = sphi 0, %s25
      %p22 = scmp.ge.s32.totalorder %s21, 6
      %s28 = sphi 0, %s40
      %s29 = sphi 0, %s36
      %s30 = sphi 0, %s28
      %s31 = sphi 0, %s29
      %s32 = sphi 0, %s30
      %s33 = sphi 0, %s31
      %s43 = sphi 0, %s45
      %s46 = sphi 0, %s43
      %s47 = sphi 0, %s46
      %s63 = sphi 0, %s47
      %s71 = sphi 0, %s73
      %s74 = sphi 0, %s71
      %s75 = sphi 0, %s74
      %s91 = sphi 0, %s75
      %s99 = sphi 0, %s101
      %s102 = sphi 0, %s99
      %s103 = sphi 0, %s102
      %s119 = sphi 0, %s103
      %s125 = sphi 0, %s127
      %s128 = sphi 0, %s125
      %s129 = sphi 0, %s128
      %s145 = sphi 0, %s129
      %s149 = sphi 0, %s149
      %s151 = sphi 0, %s149
      %s152 = sphi 0, %s151
      %s166 = sphi 0, %s152
      %s170 = sphi 0, %s170
      %s172 = sphi 0, %s170
      %s173 = sphi 0, %s172
      %s187 = sphi 0, %s173
      %s191 = sphi 0, %s191
      %s193 = sphi 0, %s191
      %s194 = sphi 0, %s193
      %s208 = sphi 0, %s194
      %s212 = sphi 0, %s212
      %s214 = sphi 0, %s212
      %s215 = sphi 0, %s214
      %s229 = sphi 0, %s215
      %s233 = sphi 0, %s233
      %s235 = sphi 0, %s233
      %s236 = sphi 0, %s235
      %s250 = sphi 0, %s236
      %s254 = sphi 0, %s254
      %s256 = sphi 0, %s254
      %s257 = sphi 0, %s256
      %s271 = sphi 0, %s257
      %s279 = sphi 0, %s281
      %s282 = sphi 0, %s279
      %s283 = sphi 0, %s282
      %s299 = sphi 0, %s283
      %s307 = sphi 0, %s309
      %s310 = sphi 0, %s307
      %s311 = sphi 0, %s310
      %s327 = sphi 0, %s311
    $region4: #{tpu_custom_call.1} parent=1 // loop_header_branch
      %24 = sbr.rel (%p22) target = $region8
    $region5: #{tpu_custom_call.1} parent=1 // loop_body
      %s26 = ssub.s32 %s21, 1
      %s27 = ssub.s32 %s21, 2
      %s34 = sadd.s32 1, %s29
      %p35 = scmp.ge.s32.totalorder %s34, 2
      %s36 = scalar_select %p35, 0, %s34
      %s37 = sadd.s32 1, %s28
      %s38 = scalar_select %p35, %s37, %s28
      %p39 = scmp.ge.s32.totalorder %s38, 2
      %s40 = scalar_select %p39, 0, %s38
      %s41 = ssub.s32 %s28, %s40
      %p42 = scmp.eq.s32.totalorder %s41, 0
      %s44 = sadd.s32 %s43, 1
      %s45 = scalar_select %p42, %s43, %s44
      %p48 = pneg %p42
      %p49 = scmp.eq.s32.totalorder %s21, 3
      %p50 = por %p48, %p49
      %p51 = scmp.ne.s32.totalorder %s43, %s46
      %p52 = scmp.eq.s32.totalorder %s21, 0
      %p53 = por %p51, %p52
      %p54 = scmp.ne.s32.totalorder %s43, %s46
      %p55 = scmp.eq.s32.totalorder %s26, 3
      %p56 = por %p54, %p55
      %p57 = scmp.ne.s32.totalorder %s46, %s47
      %p58 = scmp.eq.s32.totalorder %s26, 0
      %p59 = por %p57, %p58
      %p60 = scmp.ne.s32.totalorder %s46, %s47
      %p61 = scmp.eq.s32.totalorder %s27, 3
      %p62 = por %p60, %p61
      %p64 = scmp.ne.s32.totalorder %s47, %s63
      %p65 = scmp.eq.s32.totalorder %s27, 0
      %p66 = por %p64, %p65
      %s67 = ssub.s32 %s28, %s40
      %s68 = ssub.s32 %s29, %s36
      %s69 = sor.u32 %s67, %s68
      %p70 = scmp.eq.s32.totalorder %s69, 0
      %s72 = sadd.s32 %s71, 1
      %s73 = scalar_select %p70, %s71, %s72
      %p76 = pneg %p70
      %p77 = scmp.eq.s32.totalorder %s21, 3
      %p78 = por %p76, %p77
      %p79 = scmp.ne.s32.totalorder %s71, %s74
      %p80 = scmp.eq.s32.totalorder %s21, 0
      %p81 = por %p79, %p80
      %p82 = scmp.ne.s32.totalorder %s71, %s74
      %p83 = scmp.eq.s32.totalorder %s26, 3
      %p84 = por %p82, %p83
      %p85 = scmp.ne.s32.totalorder %s74, %s75
      %p86 = scmp.eq.s32.totalorder %s26, 0
      %p87 = por %p85, %p86
      %p88 = scmp.ne.s32.totalorder %s74, %s75
      %p89 = scmp.eq.s32.totalorder %s27, 3
      %p90 = por %p88, %p89
      %p92 = scmp.ne.s32.totalorder %s75, %s91
      %p93 = scmp.eq.s32.totalorder %s27, 0
      %p94 = por %p92, %p93
      %s95 = ssub.s32 %s28, %s40
      %s96 = ssub.s32 %s29, %s36
      %s97 = sor.u32 %s95, %s96
      %p98 = scmp.eq.s32.totalorder %s97, 0
      %s100 = sadd.s32 %s99, 1
      %s101 = scalar_select %p98, %s99, %s100
      %p104 = pneg %p98
      %p105 = scmp.eq.s32.totalorder %s21, 3
      %p106 = por %p104, %p105
      %p107 = scmp.ne.s32.totalorder %s99, %s102
      %p108 = scmp.eq.s32.totalorder %s21, 0
      %p109 = por %p107, %p108
      %p110 = scmp.ne.s32.totalorder %s99, %s102
      %p111 = scmp.eq.s32.totalorder %s26, 3
      %p112 = por %p110, %p111
      %p113 = scmp.ne.s32.totalorder %s102, %s103
      %p114 = scmp.eq.s32.totalorder %s26, 0
      %p115 = por %p113, %p114
      %p116 = scmp.ne.s32.totalorder %s102, %s103
      %p117 = scmp.eq.s32.totalorder %s27, 3
      %p118 = por %p116, %p117
      %p120 = scmp.ne.s32.totalorder %s103, %s119
      %p121 = scmp.eq.s32.totalorder %s27, 0
      %p122 = por %p120, %p121
      %s123 = ssub.s32 %s28, %s40
      %p124 = scmp.eq.s32.totalorder %s123, 0
      %s126 = sadd.s32 %s125, 1
      %s127 = scalar_select %p124, %s125, %s126
      %p130 = pneg %p124
      %p131 = scmp.eq.s32.totalorder %s21, 3
      %p132 = por %p130, %p131
      %p133 = scmp.ne.s32.totalorder %s125, %s128
      %p134 = scmp.eq.s32.totalorder %s21, 0
      %p135 = por %p133, %p134
      %p136 = scmp.ne.s32.totalorder %s125, %s128
      %p137 = scmp.eq.s32.totalorder %s26, 3
      %p138 = por %p136, %p137
      %p139 = scmp.ne.s32.totalorder %s128, %s129
      %p140 = scmp.eq.s32.totalorder %s26, 0
      %p141 = por %p139, %p140
      %p142 = scmp.ne.s32.totalorder %s128, %s129
      %p143 = scmp.eq.s32.totalorder %s27, 3
      %p144 = por %p142, %p143
      %p146 = scmp.ne.s32.totalorder %s129, %s145
      %p147 = scmp.eq.s32.totalorder %s27, 0
      %p148 = por %p146, %p147
      %s150 = sadd.s32 %s149, 1
      %p153 = scmp.eq.s32.totalorder %s21, 3
      %p154 = scmp.ne.s32.totalorder %s149, %s151
      %p155 = scmp.eq.s32.totalorder %s21, 0
      %p156 = por %p154, %p155
      %p157 = scmp.ne.s32.totalorder %s149, %s151
      %p158 = scmp.eq.s32.totalorder %s26, 3
      %p159 = por %p157, %p158
      %p160 = scmp.ne.s32.totalorder %s151, %s152
      %p161 = scmp.eq.s32.totalorder %s26, 0
      %p162 = por %p160, %p161
      %p163 = scmp.ne.s32.totalorder %s151, %s152
      %p164 = scmp.eq.s32.totalorder %s27, 3
      %p165 = por %p163, %p164
      %p167 = scmp.ne.s32.totalorder %s152, %s166
      %p168 = scmp.eq.s32.totalorder %s27, 0
      %p169 = por %p167, %p168
      %s171 = sadd.s32 %s170, 1
      %p174 = scmp.eq.s32.totalorder %s21, 3
      %p175 = scmp.ne.s32.totalorder %s170, %s172
      %p176 = scmp.eq.s32.totalorder %s21, 0
      %p177 = por %p175, %p176
      %p178 = scmp.ne.s32.totalorder %s170, %s172
      %p179 = scmp.eq.s32.totalorder %s26, 3
      %p180 = por %p178, %p179
      %p181 = scmp.ne.s32.totalorder %s172, %s173
      %p182 = scmp.eq.s32.totalorder %s26, 0
      %p183 = por %p181, %p182
      %p184 = scmp.ne.s32.totalorder %s172, %s173
      %p185 = scmp.eq.s32.totalorder %s27, 3
      %p186 = por %p184, %p185
      %p188 = scmp.ne.s32.totalorder %s173, %s187
      %p189 = scmp.eq.s32.totalorder %s27, 0
      %p190 = por %p188, %p189
      %s192 = sadd.s32 %s191, 1
      %p195 = scmp.eq.s32.totalorder %s21, 3
      %p196 = scmp.ne.s32.totalorder %s191, %s193
      %p197 = scmp.eq.s32.totalorder %s21, 0
      %p198 = por %p196, %p197
      %p199 = scmp.ne.s32.totalorder %s191, %s193
      %p200 = scmp.eq.s32.totalorder %s26, 3
      %p201 = por %p199, %p200
      %p202 = scmp.ne.s32.totalorder %s193, %s194
      %p203 = scmp.eq.s32.totalorder %s26, 0
      %p204 = por %p202, %p203
      %p205 = scmp.ne.s32.totalorder %s193, %s194
      %p206 = scmp.eq.s32.totalorder %s27, 3
      %p207 = por %p205, %p206
      %p209 = scmp.ne.s32.totalorder %s194, %s208
      %p210 = scmp.eq.s32.totalorder %s27, 0
      %p211 = por %p209, %p210
      %s213 = sadd.s32 %s212, 1
      %p216 = scmp.eq.s32.totalorder %s21, 3
      %p217 = scmp.ne.s32.totalorder %s212, %s214
      %p218 = scmp.eq.s32.totalorder %s21, 0
      %p219 = por %p217, %p218
      %p220 = scmp.ne.s32.totalorder %s212, %s214
      %p221 = scmp.eq.s32.totalorder %s26, 3
      %p222 = por %p220, %p221
      %p223 = scmp.ne.s32.totalorder %s214, %s215
      %p224 = scmp.eq.s32.totalorder %s26, 0
      %p225 = por %p223, %p224
      %p226 = scmp.ne.s32.totalorder %s214, %s215
      %p227 = scmp.eq.s32.totalorder %s27, 3
      %p228 = por %p226, %p227
      %p230 = scmp.ne.s32.totalorder %s215, %s229
      %p231 = scmp.eq.s32.totalorder %s27, 0
      %p232 = por %p230, %p231
      %s234 = sadd.s32 %s233, 1
      %p237 = scmp.eq.s32.totalorder %s21, 3
      %p238 = scmp.ne.s32.totalorder %s233, %s235
      %p239 = scmp.eq.s32.totalorder %s21, 0
      %p240 = por %p238, %p239
      %p241 = scmp.ne.s32.totalorder %s233, %s235
      %p242 = scmp.eq.s32.totalorder %s26, 3
      %p243 = por %p241, %p242
      %p244 = scmp.ne.s32.totalorder %s235, %s236
      %p245 = scmp.eq.s32.totalorder %s26, 0
      %p246 = por %p244, %p245
      %p247 = scmp.ne.s32.totalorder %s235, %s236
      %p248 = scmp.eq.s32.totalorder %s27, 3
      %p249 = por %p247, %p248
      %p251 = scmp.ne.s32.totalorder %s236, %s250
      %p252 = scmp.eq.s32.totalorder %s27, 0
      %p253 = por %p251, %p252
      %s255 = sadd.s32 %s254, 1
      %p258 = scmp.eq.s32.totalorder %s21, 3
      %p259 = scmp.ne.s32.totalorder %s254, %s256
      %p260 = scmp.eq.s32.totalorder %s21, 0
      %p261 = por %p259, %p260
      %p262 = scmp.ne.s32.totalorder %s254, %s256
      %p263 = scmp.eq.s32.totalorder %s26, 3
      %p264 = por %p262, %p263
      %p265 = scmp.ne.s32.totalorder %s256, %s257
      %p266 = scmp.eq.s32.totalorder %s26, 0
      %p267 = por %p265, %p266
      %p268 = scmp.ne.s32.totalorder %s256, %s257
      %p269 = scmp.eq.s32.totalorder %s27, 3
      %p270 = por %p268, %p269
      %p272 = scmp.ne.s32.totalorder %s257, %s271
      %p273 = scmp.eq.s32.totalorder %s27, 0
      %p274 = por %p272, %p273
      %s275 = ssub.s32 %s28, %s40
      %s276 = ssub.s32 %s29, %s36
      %s277 = sor.u32 %s275, %s276
      %p278 = scmp.eq.s32.totalorder %s277, 0
      %s280 = sadd.s32 %s279, 1
      %s281 = scalar_select %p278, %s279, %s280
      %p284 = pneg %p278
      %p285 = scmp.eq.s32.totalorder %s21, 3
      %p286 = por %p284, %p285
      %p287 = scmp.ne.s32.totalorder %s279, %s282
      %p288 = scmp.eq.s32.totalorder %s21, 0
      %p289 = por %p287, %p288
      %p290 = scmp.ne.s32.totalorder %s279, %s282
      %p291 = scmp.eq.s32.totalorder %s26, 3
      %p292 = por %p290, %p291
      %p293 = scmp.ne.s32.totalorder %s282, %s283
      %p294 = scmp.eq.s32.totalorder %s26, 0
      %p295 = por %p293, %p294
      %p296 = scmp.ne.s32.totalorder %s282, %s283
      %p297 = scmp.eq.s32.totalorder %s27, 3
      %p298 = por %p296, %p297
      %p300 = scmp.ne.s32.totalorder %s283, %s299
      %p301 = scmp.eq.s32.totalorder %s27, 0
      %p302 = por %p300, %p301
      %s303 = ssub.s32 %s28, %s40
      %s304 = ssub.s32 %s29, %s36
      %s305 = sor.u32 %s303, %s304
      %p306 = scmp.eq.s32.totalorder %s305, 0
      %s308 = sadd.s32 %s307, 1
      %s309 = scalar_select %p306, %s307, %s308
      %p312 = pneg %p306
      %p313 = scmp.eq.s32.totalorder %s21, 3
      %p314 = por %p312, %p313
      %p315 = scmp.ne.s32.totalorder %s307, %s310
      %p316 = scmp.eq.s32.totalorder %s21, 0
      %p317 = por %p315, %p316
      %p318 = scmp.ne.s32.totalorder %s307, %s310
      %p319 = scmp.eq.s32.totalorder %s26, 3
      %p320 = por %p318, %p319
      %p321 = scmp.ne.s32.totalorder %s310, %s311
      %p322 = scmp.eq.s32.totalorder %s26, 0
      %p323 = por %p321, %p322
      %p324 = scmp.ne.s32.totalorder %s310, %s311
      %p325 = scmp.eq.s32.totalorder %s27, 3
      %p326 = por %p324, %p325
      %p328 = scmp.ne.s32.totalorder %s311, %s327
      %p329 = scmp.eq.s32.totalorder %s27, 0
      %p330 = por %p328, %p329
      %p331 = scmp.le.s32.totalorder 1, %s21
      %p332 = scmp.lt.s32.totalorder %s21, 5
      %p333 = pnand %p331, %p332
      %p334 = pneg %p333
      // Predicated region
      $region9: #{tpu_custom_call.1} parent=5 // pred_check
        _
      $region10: #{tpu_custom_call.1} parent=5 // pred_check_branch
        %336 = sbr.rel (%p333) target = $region12
      $region11: #{tpu_custom_call.1} parent=5 // pred_region
        %s337 = ssub.s32 %s21, 1
        // Predicated region
        $region13: #{tpu_custom_call.1} parent=11 // pred_check
          %p338 = pneg %p162
        $region14: #{tpu_custom_call.1} parent=11 // pred_check_branch
          %340 = sbr.rel (%p338) target = $region16
        $region15: #{tpu_custom_call.1} parent=11 // pred_region
          _
        $region16: #{tpu_custom_call.1} parent=11 // pred_fallthru
          _
        // Predicated region
        $region17: #{tpu_custom_call.1} parent=11 // pred_check
          %p341 = pneg %p183
        $region18: #{tpu_custom_call.1} parent=11 // pred_check_branch
          %343 = sbr.rel (%p341) target = $region20
        $region19: #{tpu_custom_call.1} parent=11 // pred_region
          _
        $region20: #{tpu_custom_call.1} parent=11 // pred_fallthru
          _
        // Predicated region
        $region21: #{tpu_custom_call.1} parent=11 // pred_check
          %p344 = pneg %p204
        $region22: #{tpu_custom_call.1} parent=11 // pred_check_branch
          %346 = sbr.rel (%p344) target = $region24
        $region23: #{tpu_custom_call.1} parent=11 // pred_region
          _
        $region24: #{tpu_custom_call.1} parent=11 // pred_fallthru
          _
        // Predicated region
        $region25: #{tpu_custom_call.1} parent=11 // pred_check
          %p347 = pneg %p225
        $region26: #{tpu_custom_call.1} parent=11 // pred_check_branch
          %349 = sbr.rel (%p347) target = $region28
        $region27: #{tpu_custom_call.1} parent=11 // pred_region
          _
        $region28: #{tpu_custom_call.1} parent=11 // pred_fallthru
          _
        // Predicated region
        $region29: #{tpu_custom_call.1} parent=11 // pred_check
          %p350 = pneg %p246
        $region30: #{tpu_custom_call.1} parent=11 // pred_check_branch
          %352 = sbr.rel (%p350) target = $region32
        $region31: #{tpu_custom_call.1} parent=11 // pred_region
          _
        $region32: #{tpu_custom_call.1} parent=11 // pred_fallthru
          _
        // Predicated region
        $region33: #{tpu_custom_call.1} parent=11 // pred_check
          %p353 = pneg %p267
        $region34: #{tpu_custom_call.1} parent=11 // pred_check_branch
          %355 = sbr.rel (%p353) target = $region36
        $region35: #{tpu_custom_call.1} parent=11 // pred_region
          _
        $region36: #{tpu_custom_call.1} parent=11 // pred_fallthru
          _
      $region12: #{tpu_custom_call.1} parent=5 // pred_fallthru
        _
      %p356 = scmp.lt.s32.totalorder %s21, 4
      // Predicated region
      $region37: #{tpu_custom_call.1} parent=5 // pred_check
        %p357 = pneg %p356
      $region38: #{tpu_custom_call.1} parent=5 // pred_check_branch
        %359 = sbr.rel (%p357) target = $region40
      $region39: #{tpu_custom_call.1} parent=5 // pred_region
        // Predicated region
        $region41: #{tpu_custom_call.1} parent=39 // pred_check
          %p360 = pneg %p53
        $region42: #{tpu_custom_call.1} parent=39 // pred_check_branch
          %362 = sbr.rel (%p360) target = $region44
        $region43: #{tpu_custom_call.1} parent=39 // pred_region
          %p363 = scmp.lt.s32.totalorder %s28, 1
          %s364 = scalar_select %p363, %s28, 1
          %s365 = smul.addr %s364, 2
          %s366 = smul.addr %s365, 4
          %s367 = scalar_lea.vmem %s0, %s366
        $region44: #{tpu_custom_call.1} parent=39 // pred_fallthru
          _
        // Predicated region
        $region45: #{tpu_custom_call.1} parent=39 // pred_check
          %p368 = pneg %p81
        $region46: #{tpu_custom_call.1} parent=39 // pred_check_branch
          %370 = sbr.rel (%p368) target = $region48
        $region47: #{tpu_custom_call.1} parent=39 // pred_region
          %s371 = smul.u32 16, %s29
          %p372 = scmp.lt.s32.totalorder %s28, 1
          %s373 = scalar_select %p372, %s28, 1
          %p374 = scmp.lt.s32.totalorder %s371, 31
          %s375 = scalar_select %p374, %s371, 31
          %s376 = smul.addr %s373, 32
          %s377 = sadd.s32 %s375, %s376
          %s378 = smul.addr %s377, 4
          %s379 = scalar_lea.vmem %s1, %s378
          %s380 = smul.u32 16, %s29
        $region48: #{tpu_custom_call.1} parent=39 // pred_fallthru
          _
        // Predicated region
        $region49: #{tpu_custom_call.1} parent=39 // pred_check
          %p381 = pneg %p109
        $region50: #{tpu_custom_call.1} parent=39 // pred_check_branch
          %383 = sbr.rel (%p381) target = $region52
        $region51: #{tpu_custom_call.1} parent=39 // pred_region
          %p384 = scmp.lt.s32.totalorder %s28, 1
          %s385 = scalar_select %p384, %s28, 1
          %p386 = scmp.lt.s32.totalorder %s29, 1
          %s387 = scalar_select %p386, %s29, 1
          %s388 = smul.addr %s385, 2
          %s389 = sadd.s32 %s387, %s388
          %s390 = smul.addr %s389, 8
          %s391 = scalar_lea.vmem %s2, %s390
        $region52: #{tpu_custom_call.1} parent=39 // pred_fallthru
          _
        // Predicated region
        $region53: #{tpu_custom_call.1} parent=39 // pred_check
          %p392 = pneg %p135
        $region54: #{tpu_custom_call.1} parent=39 // pred_check_branch
          %394 = sbr.rel (%p392) target = $region56
        $region55: #{tpu_custom_call.1} parent=39 // pred_region
          %p395 = scmp.lt.s32.totalorder %s28, 1
          %s396 = scalar_select %p395, %s28, 1
          %s397 = scalar_lea.vmem %s3, %s396
        $region56: #{tpu_custom_call.1} parent=39 // pred_fallthru
          _
      $region40: #{tpu_custom_call.1} parent=5 // pred_fallthru
        _
      %p398 = scmp.le.s32.totalorder 1, %s21
      %p399 = scmp.lt.s32.totalorder %s21, 5
      %p400 = pnand %p398, %p399
      %p401 = pneg %p400
      // Predicated region
      $region57: #{tpu_custom_call.1} parent=5 // pred_check
        _
      $region58: #{tpu_custom_call.1} parent=5 // pred_check_branch
        %403 = sbr.rel (%p400) target = $region60
      $region59: #{tpu_custom_call.1} parent=5 // pred_region
        %s404 = ssub.s32 %s21, 1
        %p405 = scmp.lt.s32.totalorder %s30, 1
        %s406 = scalar_select %p405, %s30, 1
        %s407 = smul.addr %s406, 2
        %s408 = smul.addr %s407, 4
        %s409 = scalar_lea.vmem %s0, %s408
        %p410 = pneg %p59
        %p411 = pneg %p56
        %s412 = smul.u32 16, %s31
        %p413 = scmp.lt.s32.totalorder %s30, 1
        %s414 = scalar_select %p413, %s30, 1
        %p415 = scmp.lt.s32.totalorder %s412, 31
        %s416 = scalar_select %p415, %s412, 31
        %s417 = smul.addr %s414, 32
        %s418 = sadd.s32 %s416, %s417
        %s419 = smul.addr %s418, 4
        %s420 = scalar_lea.vmem %s1, %s419
        %p421 = pneg %p87
        %p422 = pneg %p84
        %p423 = scmp.lt.s32.totalorder %s30, 1
        %s424 = scalar_select %p423, %s30, 1
        %p425 = scmp.lt.s32.totalorder %s31, 1
        %s426 = scalar_select %p425, %s31, 1
        %s427 = smul.addr %s424, 2
        %s428 = sadd.s32 %s426, %s427
        %s429 = smul.addr %s428, 8
        %s430 = scalar_lea.vmem %s2, %s429
        %p431 = pneg %p115
        %p432 = pneg %p112
        %p433 = scmp.lt.s32.totalorder %s30, 1
        %s434 = scalar_select %p433, %s30, 1
        %s435 = scalar_lea.vmem %s3, %s434
        %p436 = pneg %p141
        %p437 = pneg %p138
        %p438 = pneg %p162
        %p439 = pneg %p159
        %p440 = pneg %p183
        %p441 = pneg %p180
        %p442 = pneg %p204
        %p443 = pneg %p201
        %p444 = pneg %p225
        %p445 = pneg %p222
        %p446 = pneg %p246
        %p447 = pneg %p243
        %p448 = pneg %p267
        %p449 = pneg %p264
        %p450 = pneg %p295
        %p451 = pneg %p292
        %s452 = sand.u32 %s282, 1
        %s453 = scalar_lea.sflag [#allocation4], %s452
        %s454 = sand.u32 %s282, 1
        %s455 = smul.addr %s454, 8
        %s456 = scalar_lea.vmem [#allocation3], %s455
        %p457 = pneg %p323
        %p458 = pneg %p320
        %s459 = smul.u32 16, %s31
        %p460 = scmp.lt.s32.totalorder %s30, 1
        %s461 = scalar_select %p460, %s30, 1
        %p462 = scmp.lt.s32.totalorder %s459, 31
        %s463 = scalar_select %p462, %s459, 31
        %s464 = smul.addr %s461, 32
        %s465 = sadd.s32 %s463, %s464
        %s466 = smul.addr %s465, 8
        %s467 = scalar_lea.vmem %s11, %s466
        %p468 = scmp.lt.s32.totalorder %s30, 1
        %s469 = scalar_select %p468, %s30, 1
        %s470 = smul.addr %s469, 2
        %s471 = smul.addr %s470, 4
        %s472 = scalar_lea.vmem %s0, %s471
        %s473 = smul.u32 16, %s31
        %p474 = scmp.lt.s32.totalorder %s30, 1
        %s475 = scalar_select %p474, %s30, 1
        %p476 = scmp.lt.s32.totalorder %s473, 31
        %s477 = scalar_select %p476, %s473, 31
        %s478 = smul.addr %s475, 32
        %s479 = sadd.s32 %s477, %s478
        %s480 = smul.addr %s479, 4
        %s481 = scalar_lea.vmem %s1, %s480
        %s482 = smul.u32 16, %s31
        %p483 = scmp.lt.s32.totalorder %s30, 1
        %s484 = scalar_select %p483, %s30, 1
        %p485 = scmp.lt.s32.totalorder %s31, 1
        %s486 = scalar_select %p485, %s31, 1
        %s487 = smul.addr %s484, 2
        %s488 = sadd.s32 %s486, %s487
        %s489 = smul.addr %s488, 8
        %s490 = scalar_lea.vmem %s2, %s489
        %p491 = scmp.lt.s32.totalorder %s30, 1
        %s492 = scalar_select %p491, %s30, 1
        %s493 = scalar_lea.vmem %s3, %s492
        %s494 = smul.u32 16, %s31
        %p495 = scmp.lt.s32.totalorder %s30, 1
        %s496 = scalar_select %p495, %s30, 1
        %p497 = scmp.lt.s32.totalorder %s494, 31
        %s498 = scalar_select %p497, %s494, 31
        %s499 = smul.addr %s496, 32
        %s500 = sadd.s32 %s498, %s499
        %s501 = smul.addr %s500, 8
        %s502 = scalar_lea.vmem %s11, %s501
        %s503 = smul.u32 16, %s31
        %p505 = scmp.eq.s32.totalorder %s31, 0
        // Predicated region
        $region61: #{tpu_custom_call.1} parent=59 // pred_check
          %p506 = pneg %p505
        $region62: #{tpu_custom_call.1} parent=59 // pred_check_branch
          %508 = sbr.rel (%p506) target = $region64
        $region63: #{tpu_custom_call.1} parent=59 // pred_region
          %v509 = vld [vmem:[%s472] sm:$0xf]
          %v510 = vld [vmem:[%s472 + $0x4] sm:$0xf]
          %v511 = vld [vmem:[%s4] sm:$0xf]
          %v512 = vld [vmem:[%s4 + $0x4] sm:$0xf]
          %v513 = vld [vmem:[%s4 + $0x8] sm:$0xf]
          %v514 = vld [vmem:[%s4 + $0xc] sm:$0xf]
          %v515 = vld [vmem:[%s7] sm:$0x1]
          %v517 = vlaneseq
          %v518 = vshrl.u32 %v517, 7
          %v519 = vsub.s32 0, %v518
          %v520 = vrot.slane %v515, %v519
          %v524 = vunpack.c.l.b16 %v509
          %v525 = vunpack.c.l.b16 %v510
          %v526 = vpack.c.b16 %v525, %v524
          %v531 = vunpack.c.l.b16 %v511
          %v532 = vunpack.c.l.b16 %v512
          %v533 = vunpack.c.l.b16 %v513
          %v534 = vunpack.c.l.b16 %v514
          %v535 = vpack.c.b16 %v532, %v531
          %v536 = vpack.c.b16 %v534, %v533
          %vm539 = vcmask 261120
          %v541 = vsel %vm539, %v526, 0
          %543 = vmatprep.subr.bf16.mxu0 0
          %544 = vmatpush1.bf16.msra.mxu0 %v535
          %545 = vmatprep.subr.bf16.mxu0 0
          %546 = vmatpush1.bf16.msra.mxu0 %v536
          %547 = vmatprep.subr.bf16.mxu0 0
          %548 = vmatpush1.bf16.msra.mxu0 0
          %549 = vmatprep.subr.bf16.mxu0 0
          %550 = vmatpush1.bf16.msra.mxu0 0
          %551 = vmatprep.subr.bf16.mxu0 0
          %552 = vmatpush1.bf16.msra.mxu0 0
          %553 = vmatprep.subr.bf16.mxu0 0
          %554 = vmatpush1.bf16.msra.mxu0 0
          %555 = vmatprep.subr.bf16.mxu0 0
          %556 = vmatpush1.bf16.msra.mxu0 0
          %557 = vmatprep.subr.bf16.mxu0 0
          %558 = vmatpush1.bf16.msra.mxu0 0
          %559 = vmatprep.subr.bf16.mxu0 0
          %560 = vmatpush1.bf16.msra.mxu0 0
          %561 = vmatprep.subr.bf16.mxu0 0
          %562 = vmatpush1.bf16.msra.mxu0 0
          %563 = vmatprep.subr.bf16.mxu0 0
          %564 = vmatpush1.bf16.msra.mxu0 0
          %565 = vmatprep.subr.bf16.mxu0 0
          %566 = vmatpush1.bf16.msra.mxu0 0
          %567 = vmatprep.subr.bf16.mxu0 0
          %568 = vmatpush1.bf16.msra.mxu0 0
          %569 = vmatprep.subr.bf16.mxu0 0
          %570 = vmatpush1.bf16.msra.mxu0 0
          %571 = vmatprep.subr.bf16.mxu0 0
          %572 = vmatpush1.bf16.msra.mxu0 0
          %573 = vmatprep.subr.bf16.mxu0 0
          %574 = vmatpush1.bf16.msra.mxu0 0
          %575 = vmatprep.mubr.bf16.mxu0 0
          %576 = vmatmul.mubr.bf16.gmra.mrb[0].mxu0 %v541
          %v577 = vpop.f32.mrb[0].mxu0
          %v578 = vadd.f32 %v520, %v577
          %v579 = vpop.f32.mrb[0].mxu0
          %v580 = vpop.f32.mrb[0].mxu0
          %v581 = vadd.f32 %v520, %v580
          %v582 = vpop.f32.mrb[0].mxu0
          %583 = vdwg.mxu0
          %vm584 = vcmask 785408
          %585 = vst.msk [vmem:[#allocation2] sm:$0xff] %vm584, %v578
          %586 = vst.msk [vmem:[#allocation2 + $0x8] sm:$0xff] %vm584, %v581
        $region64: #{tpu_custom_call.1} parent=59 // pred_fallthru
          _
        %s587 = smul.u32 %s31, 8
        %s588 = scalar_lea.vmem [#allocation2], %s587
        %v589 = vld [vmem:[%s588] sm:$0xff]
        %v590 = vld [vmem:[#allocation2] sm:$0xff]
        %v591 = vld [vmem:[#allocation2 + $0x8] sm:$0xff]
        %v592 = vld [vmem:[%s481] sm:$0xf]
        %v593 = vld [vmem:[%s481 + $0x4] sm:$0xf]
        %v594 = vld [vmem:[%s481 + $0x8] sm:$0xf]
        %v595 = vld [vmem:[%s481 + $0xc] sm:$0xf]
        %v596 = vld [vmem:[%s481 + $0x10] sm:$0xf]
        %v597 = vld [vmem:[%s481 + $0x14] sm:$0xf]
        %v598 = vld [vmem:[%s481 + $0x18] sm:$0xf]
        %v599 = vld [vmem:[%s481 + $0x1c] sm:$0xf]
        %v600 = vld [vmem:[%s481 + $0x20] sm:$0xf]
        %v601 = vld [vmem:[%s481 + $0x24] sm:$0xf]
        %v602 = vld [vmem:[%s481 + $0x28] sm:$0xf]
        %v603 = vld [vmem:[%s481 + $0x2c] sm:$0xf]
        %v604 = vld [vmem:[%s481 + $0x30] sm:$0xf]
        %v605 = vld [vmem:[%s481 + $0x34] sm:$0xf]
        %v606 = vld [vmem:[%s481 + $0x38] sm:$0xf]
        %v607 = vld [vmem:[%s481 + $0x3c] sm:$0xf]
        %v608 = vld [vmem:[%s5] sm:$0xf]
        %v609 = vld [vmem:[%s5 + $0x4] sm:$0xf]
        %v610 = vld [vmem:[%s5 + $0x8] sm:$0xf]
        %v611 = vld [vmem:[%s5 + $0xc] sm:$0xf]
        %v612 = vld [vmem:[%s8] sm:$0x1]
        %v614 = vlaneseq
        %v615 = vshrl.u32 %v614, 7
        %v616 = vsub.s32 0, %v615
        %v617 = vrot.slane %v612, %v616
        %v635 = vunpack.c.l.b16 %v592
        %v636 = vunpack.c.l.b16 %v593
        %v637 = vunpack.c.l.b16 %v594
        %v638 = vunpack.c.l.b16 %v595
        %v639 = vunpack.c.l.b16 %v596
        %v640 = vunpack.c.l.b16 %v597
        %v641 = vunpack.c.l.b16 %v598
        %v642 = vunpack.c.l.b16 %v599
        %v643 = vunpack.c.l.b16 %v600
        %v644 = vunpack.c.l.b16 %v601
        %v645 = vunpack.c.l.b16 %v602
        %v646 = vunpack.c.l.b16 %v603
        %v647 = vunpack.c.l.b16 %v604
        %v648 = vunpack.c.l.b16 %v605
        %v649 = vunpack.c.l.b16 %v606
        %v650 = vunpack.c.l.b16 %v607
        %v651 = vpack.c.b16 %v636, %v635
        %v652 = vpack.c.b16 %v638, %v637
        %v653 = vpack.c.b16 %v640, %v639
        %v654 = vpack.c.b16 %v642, %v641
        %v655 = vpack.c.b16 %v644, %v643
        %v656 = vpack.c.b16 %v646, %v645
        %v657 = vpack.c.b16 %v648, %v647
        %v658 = vpack.c.b16 %v650, %v649
        %v663 = vunpack.c.l.b16 %v608
        %v664 = vunpack.c.l.b16 %v609
        %v665 = vunpack.c.l.b16 %v610
        %v666 = vunpack.c.l.b16 %v611
        %v667 = vpack.c.b16 %v664, %v663
        %v668 = vpack.c.b16 %v666, %v665
        %vm671 = vcmask 261120
        %v673 = vsel %vm671, %v651, 0
        %v676 = vsel %vm671, %v652, 0
        %v679 = vsel %vm671, %v653, 0
        %v682 = vsel %vm671, %v654, 0
        %v685 = vsel %vm671, %v655, 0
        %v688 = vsel %vm671, %v656, 0
        %v691 = vsel %vm671, %v657, 0
        %v694 = vsel %vm671, %v658, 0
        %696 = vmatprep.subr.bf16.mxu0 0
        %697 = vmatpush1.bf16.msra.mxu0 %v667
        %698 = vmatprep.subr.bf16.mxu0 0
        %699 = vmatpush1.bf16.msra.mxu0 %v668
        %700 = vmatprep.subr.bf16.mxu0 0
        %701 = vmatpush1.bf16.msra.mxu0 0
        %702 = vmatprep.subr.bf16.mxu0 0
        %703 = vmatpush1.bf16.msra.mxu0 0
        %704 = vmatprep.subr.bf16.mxu0 0
        %705 = vmatpush1.bf16.msra.mxu0 0
        %706 = vmatprep.subr.bf16.mxu0 0
        %707 = vmatpush1.bf16.msra.mxu0 0
        %708 = vmatprep.subr.bf16.mxu0 0
        %709 = vmatpush1.bf16.msra.mxu0 0
        %710 = vmatprep.subr.bf16.mxu0 0
        %711 = vmatpush1.bf16.msra.mxu0 0
        %712 = vmatprep.subr.bf16.mxu0 0
        %713 = vmatpush1.bf16.msra.mxu0 0
        %714 = vmatprep.subr.bf16.mxu0 0
        %715 = vmatpush1.bf16.msra.mxu0 0
        %716 = vmatprep.subr.bf16.mxu0 0
        %717 = vmatpush1.bf16.msra.mxu0 0
        %718 = vmatprep.subr.bf16.mxu0 0
        %719 = vmatpush1.bf16.msra.mxu0 0
        %720 = vmatprep.subr.bf16.mxu0 0
        %721 = vmatpush1.bf16.msra.mxu0 0
        %722 = vmatprep.subr.bf16.mxu0 0
        %723 = vmatpush1.bf16.msra.mxu0 0
        %724 = vmatprep.subr.bf16.mxu0 0
        %725 = vmatpush1.bf16.msra.mxu0 0
        %726 = vmatprep.subr.bf16.mxu0 0
        %727 = vmatpush1.bf16.msra.mxu0 0
        %728 = vmatprep.mubr.bf16.mxu0 0
        %729 = vmatmul.mubr.bf16.gmra.mrb[0].mxu0 %v673
        %v730 = vpop.f32.mrb[0].mxu0
        %v731 = vadd.f32 %v617, %v730
        %v732 = vpop.f32.mrb[0].mxu0
        %v733 = vpop.f32.mrb[0].mxu0
        %v734 = vadd.f32 %v617, %v733
        %v735 = vpop.f32.mrb[0].mxu0
        %736 = vmatprep.mubr.bf16.mxu0 0
        %737 = vmatmul.mubr.bf16.gmra.mrb[0].mxu0 %v676
        %v738 = vpop.f32.mrb[0].mxu0
        %v739 = vadd.f32 %v617, %v738
        %v740 = vpop.f32.mrb[0].mxu0
        %v741 = vpop.f32.mrb[0].mxu0
        %v742 = vadd.f32 %v617, %v741
        %v743 = vpop.f32.mrb[0].mxu0
        %744 = vmatprep.mubr.bf16.mxu0 0
        %745 = vmatmul.mubr.bf16.gmra.mrb[0].mxu0 %v679
        %v746 = vpop.f32.mrb[0].mxu0
        %v747 = vadd.f32 %v617, %v746
        %v748 = vpop.f32.mrb[0].mxu0
        %v749 = vpop.f32.mrb[0].mxu0
        %v750 = vadd.f32 %v617, %v749
        %v751 = vpop.f32.mrb[0].mxu0
        %752 = vmatprep.mubr.bf16.mxu0 0
        %753 = vmatmul.mubr.bf16.gmra.mrb[0].mxu0 %v682
        %v754 = vpop.f32.mrb[0].mxu0
        %v755 = vadd.f32 %v617, %v754
        %v756 = vpop.f32.mrb[0].mxu0
        %v757 = vpop.f32.mrb[0].mxu0
        %v758 = vadd.f32 %v617, %v757
        %v759 = vpop.f32.mrb[0].mxu0
        %760 = vmatprep.mubr.bf16.mxu0 0
        %761 = vmatmul.mubr.bf16.gmra.mrb[0].mxu0 %v685
        %v762 = vpop.f32.mrb[0].mxu0
        %v763 = vadd.f32 %v617, %v762
        %v764 = vpop.f32.mrb[0].mxu0
        %v765 = vpop.f32.mrb[0].mxu0
        %v766 = vadd.f32 %v617, %v765
        %v767 = vpop.f32.mrb[0].mxu0
        %768 = vmatprep.mubr.bf16.mxu0 0
        %769 = vmatmul.mubr.bf16.gmra.mrb[0].mxu0 %v688
        %v770 = vpop.f32.mrb[0].mxu0
        %v771 = vadd.f32 %v617, %v770
        %v772 = vpop.f32.mrb[0].mxu0
        %v773 = vpop.f32.mrb[0].mxu0
        %v774 = vadd.f32 %v617, %v773
        %v775 = vpop.f32.mrb[0].mxu0
        %776 = vmatprep.mubr.bf16.mxu0 0
        %777 = vmatmul.mubr.bf16.gmra.mrb[0].mxu0 %v691
        %v778 = vpop.f32.mrb[0].mxu0
        %v779 = vadd.f32 %v617, %v778
        %v780 = vpop.f32.mrb[0].mxu0
        %v781 = vpop.f32.mrb[0].mxu0
        %v782 = vadd.f32 %v617, %v781
        %v783 = vpop.f32.mrb[0].mxu0
        %784 = vmatprep.mubr.bf16.mxu0 0
        %785 = vmatmul.mubr.bf16.gmra.mrb[0].mxu0 %v694
        %v786 = vpop.f32.mrb[0].mxu0
        %v787 = vadd.f32 %v617, %v786
        %v788 = vpop.f32.mrb[0].mxu0
        %v789 = vpop.f32.mrb[0].mxu0
        %v790 = vadd.f32 %v617, %v789
        %v791 = vpop.f32.mrb[0].mxu0
        %792 = vdwg.mxu0
        %v793 = vld [vmem:[%s490] sm:$0xff]
        %v794 = vld [vmem:[%s493] sm:$0x1]
        %vm795 = vcmp.gt.f32.partialorder %v794, 0.0
        %v796 = vld [vmem:[%s9] sm:$0x3]
        %v798 = vcombine.high %v589, %v589
        %v800 = vunpack.c.l.s4 1966171168
        %v801 = vunpack.c.0.s8 %v800
        %v802 = vlaneseq
        %v803 = vshrl.u32 %v802, 7
        %v804 = vsub.s32 %v801, %v803
        %v805 = vrot.slane %v589, %v804
        %v807 = vunpack.c.l.s4 1966171168
        %v808 = vunpack.c.0.s8 %v807
        %v809 = vlaneseq
        %v810 = vshrl.u32 %v809, 7
        %v811 = vsub.s32 %v808, %v810
        %v812 = vrot.slane %v798, %v811
        %v813 = vcombine.high %v805, %v805
        %v814 = vcombine.high %v812, %v812
        %v816 = vunpack.c.l.s4 1966171168
        %v817 = vunpack.c.0.s8 %v816
        %v818 = vlaneseq
        %v819 = vshrl.u32 %v818, 7
        %v820 = vsub.s32 %v817, %v819
        %v821 = vrot.slane %v805, %v820
        %v823 = vunpack.c.l.s4 1966171168
        %v824 = vunpack.c.0.s8 %v823
        %v825 = vlaneseq
        %v826 = vshrl.u32 %v825, 7
        %v827 = vsub.s32 %v824, %v826
        %v828 = vrot.slane %v812, %v827
        %v830 = vunpack.c.l.s4 1966171168
        %v831 = vunpack.c.0.s8 %v830
        %v832 = vlaneseq
        %v833 = vshrl.u32 %v832, 7
        %v834 = vsub.s32 %v831, %v833
        %v835 = vrot.slane %v813, %v834
        %v837 = vunpack.c.l.s4 1966171168
        %v838 = vunpack.c.0.s8 %v837
        %v839 = vlaneseq
        %v840 = vshrl.u32 %v839, 7
        %v841 = vsub.s32 %v838, %v840
        %v842 = vrot.slane %v814, %v841
        %v843 = vcombine.high %v821, %v821
        %v844 = vcombine.high %v828, %v828
        %v845 = vcombine.high %v835, %v835
        %v846 = vcombine.high %v842, %v842
        %v855 = vpack.c.bf16 %v821, %v821
        %v856 = vpack.c.bf16 %v835, %v835
        %v857 = vpack.c.bf16 %v843, %v843
        %v858 = vpack.c.bf16 %v845, %v845
        %v859 = vpack.c.bf16 %v828, %v828
        %v860 = vpack.c.bf16 %v842, %v842
        %v861 = vpack.c.bf16 %v844, %v844
        %v862 = vpack.c.bf16 %v846, %v846
        %v863 = vpack.c.bf16 %v734, %v731
        %v864 = vpack.c.bf16 %v742, %v739
        %v865 = vpack.c.bf16 %v750, %v747
        %v866 = vpack.c.bf16 %v758, %v755
        %v867 = vpack.c.bf16 %v766, %v763
        %v868 = vpack.c.bf16 %v774, %v771
        %v869 = vpack.c.bf16 %v782, %v779
        %v870 = vpack.c.bf16 %v790, %v787
        %vm871 = vcmask 130048
        %v873 = vsel %vm871, %v855, 0
        %v876 = vsel %vm871, %v863, 0
        %878 = vmatprep.subr.bf16.mxu0 0
        %879 = vmatpush1.bf16.xpose.msra.mxu0 %v876
        %880 = vmatprep.subr.bf16.mxu0 0
        %881 = vmatpush1.bf16.xpose.msra.mxu0 0
        %882 = vmatprep.subr.bf16.mxu0 0
        %883 = vmatpush1.bf16.xpose.msra.mxu0 0
        %884 = vmatprep.subr.bf16.mxu0 0
        %885 = vmatpush1.bf16.xpose.msra.mxu0 0
        %886 = vmatprep.subr.bf16.mxu0 0
        %887 = vmatpush1.bf16.xpose.msra.mxu0 0
        %888 = vmatprep.subr.bf16.mxu0 0
        %889 = vmatpush1.bf16.xpose.msra.mxu0 0
        %890 = vmatprep.subr.bf16.mxu0 0
        %891 = vmatpush1.bf16.xpose.msra.mxu0 0
        %892 = vmatprep.subr.bf16.mxu0 0
        %893 = vmatpush1.bf16.xpose.msra.mxu0 0
        %894 = vmatprep.subr.bf16.mxu0 0
        %895 = vmatpush1.bf16.xpose.msra.mxu0 0
        %896 = vmatprep.subr.bf16.mxu0 0
        %897 = vmatpush1.bf16.xpose.msra.mxu0 0
        %898 = vmatprep.subr.bf16.mxu0 0
        %899 = vmatpush1.bf16.xpose.msra.mxu0 0
        %900 = vmatprep.subr.bf16.mxu0 0
        %901 = vmatpush1.bf16.xpose.msra.mxu0 0
        %902 = vmatprep.subr.bf16.mxu0 0
        %903 = vmatpush1.bf16.xpose.msra.mxu0 0
        %904 = vmatprep.subr.bf16.mxu0 0
        %905 = vmatpush1.bf16.xpose.msra.mxu0 0
        %906 = vmatprep.subr.bf16.mxu0 0
        %907 = vmatpush1.bf16.xpose.msra.mxu0 0
        %908 = vmatprep.subr.bf16.mxu0 0
        %909 = vmatpush1.bf16.xpose.msra.mxu0 0
        %910 = vmatprep.mubr.bf16.mxu0 0
        %911 = vmatmul.mubr.bf16.gmra.mrb[0].mxu0 %v873
        %v912 = vpop.f32.mrb[0].mxu0
        %v913 = vadd.f32 0.0, %v912
        %v914 = vpop.f32.mrb[0].mxu0
        %v915 = vpop.f32.mrb[0].mxu0
        %v916 = vpop.f32.mrb[0].mxu0
        %917 = vdwg.mxu0
        %v919 = vsel %vm871, %v856, 0
        %v922 = vsel %vm871, %v864, 0
        %924 = vmatprep.subr.bf16.mxu0 0
        %925 = vmatpush1.bf16.xpose.msra.mxu0 %v922
        %926 = vmatprep.subr.bf16.mxu0 0
        %927 = vmatpush1.bf16.xpose.msra.mxu0 0
        %928 = vmatprep.subr.bf16.mxu0 0
        %929 = vmatpush1.bf16.xpose.msra.mxu0 0
        %930 = vmatprep.subr.bf16.mxu0 0
        %931 = vmatpush1.bf16.xpose.msra.mxu0 0
        %932 = vmatprep.subr.bf16.mxu0 0
        %933 = vmatpush1.bf16.xpose.msra.mxu0 0
        %934 = vmatprep.subr.bf16.mxu0 0
        %935 = vmatpush1.bf16.xpose.msra.mxu0 0
        %936 = vmatprep.subr.bf16.mxu0 0
        %937 = vmatpush1.bf16.xpose.msra.mxu0 0
        %938 = vmatprep.subr.bf16.mxu0 0
        %939 = vmatpush1.bf16.xpose.msra.mxu0 0
        %940 = vmatprep.subr.bf16.mxu0 0
        %941 = vmatpush1.bf16.xpose.msra.mxu0 0
        %942 = vmatprep.subr.bf16.mxu0 0
        %943 = vmatpush1.bf16.xpose.msra.mxu0 0
        %944 = vmatprep.subr.bf16.mxu0 0
        %945 = vmatpush1.bf16.xpose.msra.mxu0 0
        %946 = vmatprep.subr.bf16.mxu0 0
        %947 = vmatpush1.bf16.xpose.msra.mxu0 0
        %948 = vmatprep.subr.bf16.mxu0 0
        %949 = vmatpush1.bf16.xpose.msra.mxu0 0
        %950 = vmatprep.subr.bf16.mxu0 0
        %951 = vmatpush1.bf16.xpose.msra.mxu0 0
        %952 = vmatprep.subr.bf16.mxu0 0
        %953 = vmatpush1.bf16.xpose.msra.mxu0 0
        %954 = vmatprep.subr.bf16.mxu0 0
        %955 = vmatpush1.bf16.xpose.msra.mxu0 0
        %956 = vmatprep.mubr.bf16.mxu0 0
        %957 = vmatmul.mubr.bf16.gmra.mrb[0].mxu0 %v919
        %v958 = vpop.f32.mrb[0].mxu0
        %v959 = vadd.f32 0.0, %v958
        %v960 = vpop.f32.mrb[0].mxu0
        %v961 = vpop.f32.mrb[0].mxu0
        %v962 = vpop.f32.mrb[0].mxu0
        %963 = vdwg.mxu0
        %v965 = vsel %vm871, %v857, 0
        %v968 = vsel %vm871, %v865, 0
        %970 = vmatprep.subr.bf16.mxu0 0
        %971 = vmatpush1.bf16.xpose.msra.mxu0 %v968
        %972 = vmatprep.subr.bf16.mxu0 0
        %973 = vmatpush1.bf16.xpose.msra.mxu0 0
        %974 = vmatprep.subr.bf16.mxu0 0
        %975 = vmatpush1.bf16.xpose.msra.mxu0 0
        %976 = vmatprep.subr.bf16.mxu0 0
        %977 = vmatpush1.bf16.xpose.msra.mxu0 0
        %978 = vmatprep.subr.bf16.mxu0 0
        %979 = vmatpush1.bf16.xpose.msra.mxu0 0
        %980 = vmatprep.subr.bf16.mxu0 0
        %981 = vmatpush1.bf16.xpose.msra.mxu0 0
        %982 = vmatprep.subr.bf16.mxu0 0
        %983 = vmatpush1.bf16.xpose.msra.mxu0 0
        %984 = vmatprep.subr.bf16.mxu0 0
        %985 = vmatpush1.bf16.xpose.msra.mxu0 0
        %986 = vmatprep.subr.bf16.mxu0 0
        %987 = vmatpush1.bf16.xpose.msra.mxu0 0
        %988 = vmatprep.subr.bf16.mxu0 0
        %989 = vmatpush1.bf16.xpose.msra.mxu0 0
        %990 = vmatprep.subr.bf16.mxu0 0
        %991 = vmatpush1.bf16.xpose.msra.mxu0 0
        %992 = vmatprep.subr.bf16.mxu0 0
        %993 = vmatpush1.bf16.xpose.msra.mxu0 0
        %994 = vmatprep.subr.bf16.mxu0 0
        %995 = vmatpush1.bf16.xpose.msra.mxu0 0
        %996 = vmatprep.subr.bf16.mxu0 0
        %997 = vmatpush1.bf16.xpose.msra.mxu0 0
        %998 = vmatprep.subr.bf16.mxu0 0
        %999 = vmatpush1.bf16.xpose.msra.mxu0 0
        %1000 = vmatprep.subr.bf16.mxu0 0
        %1001 = vmatpush1.bf16.xpose.msra.mxu0 0
        %1002 = vmatprep.mubr.bf16.mxu0 0
        %1003 = vmatmul.mubr.bf16.gmra.mrb[0].mxu0 %v965
        %v1004 = vpop.f32.mrb[0].mxu0
        %v1005 = vadd.f32 0.0, %v1004
        %v1006 = vpop.f32.mrb[0].mxu0
        %v1007 = vpop.f32.mrb[0].mxu0
        %v1008 = vpop.f32.mrb[0].mxu0
        %1009 = vdwg.mxu0
        %v1011 = vsel %vm871, %v858, 0
        %v1014 = vsel %vm871, %v866, 0
        %1016 = vmatprep.subr.bf16.mxu0 0
        %1017 = vmatpush1.bf16.xpose.msra.mxu0 %v1014
        %1018 = vmatprep.subr.bf16.mxu0 0
        %1019 = vmatpush1.bf16.xpose.msra.mxu0 0
        %1020 = vmatprep.subr.bf16.mxu0 0
        %1021 = vmatpush1.bf16.xpose.msra.mxu0 0
        %1022 = vmatprep.subr.bf16.mxu0 0
        %1023 = vmatpush1.bf16.xpose.msra.mxu0 0
        %1024 = vmatprep.subr.bf16.mxu0 0
        %1025 = vmatpush1.bf16.xpose.msra.mxu0 0
        %1026 = vmatprep.subr.bf16.mxu0 0
        %1027 = vmatpush1.bf16.xpose.msra.mxu0 0
        %1028 = vmatprep.subr.bf16.mxu0 0
        %1029 = vmatpush1.bf16.xpose.msra.mxu0 0
        %1030 = vmatprep.subr.bf16.mxu0 0
        %1031 = vmatpush1.bf16.xpose.msra.mxu0 0
        %1032 = vmatprep.subr.bf16.mxu0 0
        %1033 = vmatpush1.bf16.xpose.msra.mxu0 0
        %1034 = vmatprep.subr.bf16.mxu0 0
        %1035 = vmatpush1.bf16.xpose.msra.mxu0 0
        %1036 = vmatprep.subr.bf16.mxu0 0
        %1037 = vmatpush1.bf16.xpose.msra.mxu0 0
        %1038 = vmatprep.subr.bf16.mxu0 0
        %1039 = vmatpush1.bf16.xpose.msra.mxu0 0
        %1040 = vmatprep.subr.bf16.mxu0 0
        %1041 = vmatpush1.bf16.xpose.msra.mxu0 0
        %1042 = vmatprep.subr.bf16.mxu0 0
        %1043 = vmatpush1.bf16.xpose.msra.mxu0 0
        %1044 = vmatprep.subr.bf16.mxu0 0
        %1045 = vmatpush1.bf16.xpose.msra.mxu0 0
        %1046 = vmatprep.subr.bf16.mxu0 0
        %1047 = vmatpush1.bf16.xpose.msra.mxu0 0
        %1048 = vmatprep.mubr.bf16.mxu0 0
        %1049 = vmatmul.mubr.bf16.gmra.mrb[0].mxu0 %v1011
        %v1050 = vpop.f32.mrb[0].mxu0
        %v1051 = vadd.f32 0.0, %v1050
        %v1052 = vpop.f32.mrb[0].mxu0
        %v1053 = vpop.f32.mrb[0].mxu0
        %v1054 = vpop.f32.mrb[0].mxu0
        %1055 = vdwg.mxu0
        %v1057 = vsel %vm871, %v859, 0
        %v1060 = vsel %vm871, %v867, 0
        %1062 = vmatprep.subr.bf16.mxu0 0
        %1063 = vmatpush1.bf16.xpose.msra.mxu0 %v1060
        %1064 = vmatprep.subr.bf16.mxu0 0
        %1065 = vmatpush1.bf16.xpose.msra.mxu0 0
        %1066 = vmatprep.subr.bf16.mxu0 0
        %1067 = vmatpush1.bf16.xpose.msra.mxu0 0
        %1068 = vmatprep.subr.bf16.mxu0 0
        %1069 = vmatpush1.bf16.xpose.msra.mxu0 0
        %1070 = vmatprep.subr.bf16.mxu0 0
        %1071 = vmatpush1.bf16.xpose.msra.mxu0 0
        %1072 = vmatprep.subr.bf16.mxu0 0
        %1073 = vmatpush1.bf16.xpose.msra.mxu0 0
        %1074 = vmatprep.subr.bf16.mxu0 0
        %1075 = vmatpush1.bf16.xpose.msra.mxu0 0
        %1076 = vmatprep.subr.bf16.mxu0 0
        %1077 = vmatpush1.bf16.xpose.msra.mxu0 0
        %1078 = vmatprep.subr.bf16.mxu0 0
        %1079 = vmatpush1.bf16.xpose.msra.mxu0 0
        %1080 = vmatprep.subr.bf16.mxu0 0
        %1081 = vmatpush1.bf16.xpose.msra.mxu0 0
        %1082 = vmatprep.subr.bf16.mxu0 0
        %1083 = vmatpush1.bf16.xpose.msra.mxu0 0
        %1084 = vmatprep.subr.bf16.mxu0 0
        %1085 = vmatpush1.bf16.xpose.msra.mxu0 0
        %1086 = vmatprep.subr.bf16.mxu0 0
        %1087 = vmatpush1.bf16.xpose.msra.mxu0 0
        %1088 = vmatprep.subr.bf16.mxu0 0
        %1089 = vmatpush1.bf16.xpose.msra.mxu0 0
        %1090 = vmatprep.subr.bf16.mxu0 0
        %1091 = vmatpush1.bf16.xpose.msra.mxu0 0
        %1092 = vmatprep.subr.bf16.mxu0 0
        %1093 = vmatpush1.bf16.xpose.msra.mxu0 0
        %1094 = vmatprep.mubr.bf16.mxu0 0
        %1095 = vmatmul.mubr.bf16.gmra.mrb[0].mxu0 %v1057
        %v1096 = vpop.f32.mrb[0].mxu0
        %v1097 = vadd.f32 0.0, %v1096
        %v1098 = vpop.f32.mrb[0].mxu0
        %v1099 = vpop.f32.mrb[0].mxu0
        %v1100 = vpop.f32.mrb[0].mxu0
        %1101 = vdwg.mxu0
        %v1103 = vsel %vm871, %v860, 0
        %v1106 = vsel %vm871, %v868, 0
        %1108 = vmatprep.subr.bf16.mxu0 0
        %1109 = vmatpush1.bf16.xpose.msra.mxu0 %v1106
        %1110 = vmatprep.subr.bf16.mxu0 0
        %1111 = vmatpush1.bf16.xpose.msra.mxu0 0
        %1112 = vmatprep.subr.bf16.mxu0 0
        %1113 = vmatpush1.bf16.xpose.msra.mxu0 0
        %1114 = vmatprep.subr.bf16.mxu0 0
        %1115 = vmatpush1.bf16.xpose.msra.mxu0 0
        %1116 = vmatprep.subr.bf16.mxu0 0
        %1117 = vmatpush1.bf16.xpose.msra.mxu0 0
        %1118 = vmatprep.subr.bf16.mxu0 0
        %1119 = vmatpush1.bf16.xpose.msra.mxu0 0
        %1120 = vmatprep.subr.bf16.mxu0 0
        %1121 = vmatpush1.bf16.xpose.msra.mxu0 0
        %1122 = vmatprep.subr.bf16.mxu0 0
        %1123 = vmatpush1.bf16.xpose.msra.mxu0 0
        %1124 = vmatprep.subr.bf16.mxu0 0
        %1125 = vmatpush1.bf16.xpose.msra.mxu0 0
        %1126 = vmatprep.subr.bf16.mxu0 0
        %1127 = vmatpush1.bf16.xpose.msra.mxu0 0
        %1128 = vmatprep.subr.bf16.mxu0 0
        %1129 = vmatpush1.bf16.xpose.msra.mxu0 0
        %1130 = vmatprep.subr.bf16.mxu0 0
        %1131 = vmatpush1.bf16.xpose.msra.mxu0 0
        %1132 = vmatprep.subr.bf16.mxu0 0
        %1133 = vmatpush1.bf16.xpose.msra.mxu0 0
        %1134 = vmatprep.subr.bf16.mxu0 0
        %1135 = vmatpush1.bf16.xpose.msra.mxu0 0
        %1136 = vmatprep.subr.bf16.mxu0 0
        %1137 = vmatpush1.bf16.xpose.msra.mxu0 0
        %1138 = vmatprep.subr.bf16.mxu0 0
        %1139 = vmatpush1.bf16.xpose.msra.mxu0 0
        %1140 = vmatprep.mubr.bf16.mxu0 0
        %1141 = vmatmul.mubr.bf16.gmra.mrb[0].mxu0 %v1103
        %v1142 = vpop.f32.mrb[0].mxu0
        %v1143 = vadd.f32 0.0, %v1142
        %v1144 = vpop.f32.mrb[0].mxu0
        %v1145 = vpop.f32.mrb[0].mxu0
        %v1146 = vpop.f32.mrb[0].mxu0
        %1147 = vdwg.mxu0
        %v1149 = vsel %vm871, %v861, 0
        %v1152 = vsel %vm871, %v869, 0
        %1154 = vmatprep.subr.bf16.mxu0 0
        %1155 = vmatpush1.bf16.xpose.msra.mxu0 %v1152
        %1156 = vmatprep.subr.bf16.mxu0 0
        %1157 = vmatpush1.bf16.xpose.msra.mxu0 0
        %1158 = vmatprep.subr.bf16.mxu0 0
        %1159 = vmatpush1.bf16.xpose.msra.mxu0 0
        %1160 = vmatprep.subr.bf16.mxu0 0
        %1161 = vmatpush1.bf16.xpose.msra.mxu0 0
        %1162 = vmatprep.subr.bf16.mxu0 0
        %1163 = vmatpush1.bf16.xpose.msra.mxu0 0
        %1164 = vmatprep.subr.bf16.mxu0 0
        %1165 = vmatpush1.bf16.xpose.msra.mxu0 0
        %1166 = vmatprep.subr.bf16.mxu0 0
        %1167 = vmatpush1.bf16.xpose.msra.mxu0 0
        %1168 = vmatprep.subr.bf16.mxu0 0
        %1169 = vmatpush1.bf16.xpose.msra.mxu0 0
        %1170 = vmatprep.subr.bf16.mxu0 0
        %1171 = vmatpush1.bf16.xpose.msra.mxu0 0
        %1172 = vmatprep.subr.bf16.mxu0 0
        %1173 = vmatpush1.bf16.xpose.msra.mxu0 0
        %1174 = vmatprep.subr.bf16.mxu0 0
        %1175 = vmatpush1.bf16.xpose.msra.mxu0 0
        %1176 = vmatprep.subr.bf16.mxu0 0
        %1177 = vmatpush1.bf16.xpose.msra.mxu0 0
        %1178 = vmatprep.subr.bf16.mxu0 0
        %1179 = vmatpush1.bf16.xpose.msra.mxu0 0
        %1180 = vmatprep.subr.bf16.mxu0 0
        %1181 = vmatpush1.bf16.xpose.msra.mxu0 0
        %1182 = vmatprep.subr.bf16.mxu0 0
        %1183 = vmatpush1.bf16.xpose.msra.mxu0 0
        %1184 = vmatprep.subr.bf16.mxu0 0
        %1185 = vmatpush1.bf16.xpose.msra.mxu0 0
        %1186 = vmatprep.mubr.bf16.mxu0 0
        %1187 = vmatmul.mubr.bf16.gmra.mrb[0].mxu0 %v1149
        %v1188 = vpop.f32.mrb[0].mxu0
        %v1189 = vadd.f32 0.0, %v1188
        %v1190 = vpop.f32.mrb[0].mxu0
        %v1191 = vpop.f32.mrb[0].mxu0
        %v1192 = vpop.f32.mrb[0].mxu0
        %1193 = vdwg.mxu0
        %v1195 = vsel %vm871, %v862, 0
        %v1198 = vsel %vm871, %v870, 0
        %1200 = vmatprep.subr.bf16.mxu0 0
        %1201 = vmatpush1.bf16.xpose.msra.mxu0 %v1198
        %1202 = vmatprep.subr.bf16.mxu0 0
        %1203 = vmatpush1.bf16.xpose.msra.mxu0 0
        %1204 = vmatprep.subr.bf16.mxu0 0
        %1205 = vmatpush1.bf16.xpose.msra.mxu0 0
        %1206 = vmatprep.subr.bf16.mxu0 0
        %1207 = vmatpush1.bf16.xpose.msra.mxu0 0
        %1208 = vmatprep.subr.bf16.mxu0 0
        %1209 = vmatpush1.bf16.xpose.msra.mxu0 0
        %1210 = vmatprep.subr.bf16.mxu0 0
        %1211 = vmatpush1.bf16.xpose.msra.mxu0 0
        %1212 = vmatprep.subr.bf16.mxu0 0
        %1213 = vmatpush1.bf16.xpose.msra.mxu0 0
        %1214 = vmatprep.subr.bf16.mxu0 0
        %1215 = vmatpush1.bf16.xpose.msra.mxu0 0
        %1216 = vmatprep.subr.bf16.mxu0 0
        %1217 = vmatpush1.bf16.xpose.msra.mxu0 0
        %1218 = vmatprep.subr.bf16.mxu0 0
        %1219 = vmatpush1.bf16.xpose.msra.mxu0 0
        %1220 = vmatprep.subr.bf16.mxu0 0
        %1221 = vmatpush1.bf16.xpose.msra.mxu0 0
        %1222 = vmatprep.subr.bf16.mxu0 0
        %1223 = vmatpush1.bf16.xpose.msra.mxu0 0
        %1224 = vmatprep.subr.bf16.mxu0 0
        %1225 = vmatpush1.bf16.xpose.msra.mxu0 0
        %1226 = vmatprep.subr.bf16.mxu0 0
        %1227 = vmatpush1.bf16.xpose.msra.mxu0 0
        %1228 = vmatprep.subr.bf16.mxu0 0
        %1229 = vmatpush1.bf16.xpose.msra.mxu0 0
        %1230 = vmatprep.subr.bf16.mxu0 0
        %1231 = vmatpush1.bf16.xpose.msra.mxu0 0
        %1232 = vmatprep.mubr.bf16.mxu0 0
        %1233 = vmatmul.mubr.bf16.gmra.mrb[0].mxu0 %v1195
        %v1234 = vpop.f32.mrb[0].mxu0
        %v1235 = vadd.f32 0.0, %v1234
        %v1236 = vpop.f32.mrb[0].mxu0
        %v1237 = vpop.f32.mrb[0].mxu0
        %v1238 = vpop.f32.mrb[0].mxu0
        %1239 = vdwg.mxu0
        %v1240 = vmul.f32 %v913, 0.25
        %v1241 = vmul.f32 %v959, 0.25
        %v1242 = vmul.f32 %v1005, 0.25
        %v1243 = vmul.f32 %v1051, 0.25
        %v1244 = vmul.f32 %v1097, 0.25
        %v1245 = vmul.f32 %v1143, 0.25
        %v1246 = vmul.f32 %v1189, 0.25
        %v1247 = vmul.f32 %v1235, 0.25
        %v1248 = vsel %vm795, 1, 0
        %vm1249 = vcmp.eq.s32.totalorder %v1248, 1
        %v1250 = vsel %vm1249, %v1240, -1e+09
        %v1251 = vsel %vm1249, %v1241, -1e+09
        %v1252 = vsel %vm1249, %v1242, -1e+09
        %v1253 = vsel %vm1249, %v1243, -1e+09
        %v1254 = vsel %vm1249, %v1244, -1e+09
        %v1255 = vsel %vm1249, %v1245, -1e+09
        %v1256 = vsel %vm1249, %v1246, -1e+09
        %v1257 = vsel %vm1249, %v1247, -1e+09
        %vm1258 = vcmask 122880
        %v1259 = vsel %vm1258, %v1250, -inf
        %1260 = vmax.xlane.f32.xlu0 %v1259
        %v1261 = vpop.xlane.xlu0 %1260
        %v1262 = vsel %vm1258, %v1251, -inf
        %1263 = vmax.xlane.f32.xlu0 %v1262
        %v1264 = vpop.xlane.xlu0 %1263
        %v1265 = vsel %vm1258, %v1252, -inf
        %1266 = vmax.xlane.f32.xlu0 %v1265
        %v1267 = vpop.xlane.xlu0 %1266
        %v1268 = vsel %vm1258, %v1253, -inf
        %1269 = vmax.xlane.f32.xlu0 %v1268
        %v1270 = vpop.xlane.xlu0 %1269
        %v1271 = vsel %vm1258, %v1254, -inf
        %1272 = vmax.xlane.f32.xlu0 %v1271
        %v1273 = vpop.xlane.xlu0 %1272
        %v1274 = vsel %vm1258, %v1255, -inf
        %1275 = vmax.xlane.f32.xlu0 %v1274
        %v1276 = vpop.xlane.xlu0 %1275
        %v1277 = vsel %vm1258, %v1256, -inf
        %1278 = vmax.xlane.f32.xlu0 %v1277
        %v1279 = vpop.xlane.xlu0 %1278
        %v1280 = vsel %vm1258, %v1257, -inf
        %1281 = vmax.xlane.f32.xlu0 %v1280
        %v1282 = vpop.xlane.xlu0 %1281
        %v1283 = vsub.f32 %v1250, %v1261
        %v1284 = vsub.f32 %v1251, %v1264
        %v1285 = vsub.f32 %v1252, %v1267
        %v1286 = vsub.f32 %v1253, %v1270
        %v1287 = vsub.f32 %v1254, %v1273
        %v1288 = vsub.f32 %v1255, %v1276
        %v1289 = vsub.f32 %v1256, %v1279
        %v1290 = vsub.f32 %v1257, %v1282
        %v1291 = vmul.f32 %v1283, 1.442695
        %v1292 = vpow.pop %v1291
        %v1293 = vmul.f32 %v1284, 1.442695
        %v1294 = vpow.pop %v1293
        %v1295 = vmul.f32 %v1285, 1.442695
        %v1296 = vpow.pop %v1295
        %v1297 = vmul.f32 %v1286, 1.442695
        %v1298 = vpow.pop %v1297
        %v1299 = vmul.f32 %v1287, 1.442695
        %v1300 = vpow.pop %v1299
        %v1301 = vmul.f32 %v1288, 1.442695
        %v1302 = vpow.pop %v1301
        %v1303 = vmul.f32 %v1289, 1.442695
        %v1304 = vpow.pop %v1303
        %v1305 = vmul.f32 %v1290, 1.442695
        %v1306 = vpow.pop %v1305
        %v1307 = vsel %vm1258, %v1292, 0.0
        %1308 = vadd.xlane.f32.xlu0 %v1307
        %v1309 = vpop.xlane.xlu0 %1308
        %v1310 = vsel %vm1258, %v1294, 0.0
        %1311 = vadd.xlane.f32.xlu0 %v1310
        %v1312 = vpop.xlane.xlu0 %1311
        %v1313 = vsel %vm1258, %v1296, 0.0
        %1314 = vadd.xlane.f32.xlu0 %v1313
        %v1315 = vpop.xlane.xlu0 %1314
        %v1316 = vsel %vm1258, %v1298, 0.0
        %1317 = vadd.xlane.f32.xlu0 %v1316
        %v1318 = vpop.xlane.xlu0 %1317
        %v1319 = vsel %vm1258, %v1300, 0.0
        %1320 = vadd.xlane.f32.xlu0 %v1319
        %v1321 = vpop.xlane.xlu0 %1320
        %v1322 = vsel %vm1258, %v1302, 0.0
        %1323 = vadd.xlane.f32.xlu0 %v1322
        %v1324 = vpop.xlane.xlu0 %1323
        %v1325 = vsel %vm1258, %v1304, 0.0
        %1326 = vadd.xlane.f32.xlu0 %v1325
        %v1327 = vpop.xlane.xlu0 %1326
        %v1328 = vsel %vm1258, %v1306, 0.0
        %1329 = vadd.xlane.f32.xlu0 %v1328
        %v1330 = vpop.xlane.xlu0 %1329
        %v1331 = vrcp.pop %v1309
        %v1332 = vrcp.pop %v1312
        %v1333 = vrcp.pop %v1315
        %v1334 = vrcp.pop %v1318
        %v1335 = vrcp.pop %v1321
        %v1336 = vrcp.pop %v1324
        %v1337 = vrcp.pop %v1327
        %v1338 = vrcp.pop %v1330
        %v1339 = vmul.f32 %v1292, %v1331
        %v1340 = vmul.f32 %v1294, %v1332
        %v1341 = vmul.f32 %v1296, %v1333
        %v1342 = vmul.f32 %v1298, %v1334
        %v1343 = vmul.f32 %v1300, %v1335
        %v1344 = vmul.f32 %v1302, %v1336
        %v1345 = vmul.f32 %v1304, %v1337
        %v1346 = vmul.f32 %v1306, %v1338
        %v1347 = vpack.c.bf16 %v1339, %v1339
        %v1348 = vpack.c.bf16 %v1340, %v1340
        %v1349 = vpack.c.bf16 %v1341, %v1341
        %v1350 = vpack.c.bf16 %v1342, %v1342
        %v1351 = vpack.c.bf16 %v1343, %v1343
        %v1352 = vpack.c.bf16 %v1344, %v1344
        %v1353 = vpack.c.bf16 %v1345, %v1345
        %v1354 = vpack.c.bf16 %v1346, %v1346
        %1356 = vrot.lane.b32.xlu0 %v863, 112
        %v1357 = vpop.permute.xlu0 %1356
        %v1360 = vsel %vm871, %v1347, 0
        %1362 = vmatprep.subr.bf16.mxu0 0
        %1363 = vmatpush1.bf16.msra.mxu0 %v1357
        %1364 = vmatprep.subr.bf16.mxu0 0
        %1365 = vmatpush1.bf16.msra.mxu0 0
        %1366 = vmatprep.subr.bf16.mxu0 0
        %1367 = vmatpush1.bf16.msra.mxu0 0
        %1368 = vmatprep.subr.bf16.mxu0 0
        %1369 = vmatpush1.bf16.msra.mxu0 0
        %1370 = vmatprep.subr.bf16.mxu0 0
        %1371 = vmatpush1.bf16.msra.mxu0 0
        %1372 = vmatprep.subr.bf16.mxu0 0
        %1373 = vmatpush1.bf16.msra.mxu0 0
        %1374 = vmatprep.subr.bf16.mxu0 0
        %1375 = vmatpush1.bf16.msra.mxu0 0
        %1376 = vmatprep.subr.bf16.mxu0 0
        %1377 = vmatpush1.bf16.msra.mxu0 0
        %1378 = vmatprep.subr.bf16.mxu0 0
        %1379 = vmatpush1.bf16.msra.mxu0 0
        %1380 = vmatprep.subr.bf16.mxu0 0
        %1381 = vmatpush1.bf16.msra.mxu0 0
        %1382 = vmatprep.subr.bf16.mxu0 0
        %1383 = vmatpush1.bf16.msra.mxu0 0
        %1384 = vmatprep.subr.bf16.mxu0 0
        %1385 = vmatpush1.bf16.msra.mxu0 0
        %1386 = vmatprep.subr.bf16.mxu0 0
        %1387 = vmatpush1.bf16.msra.mxu0 0
        %1388 = vmatprep.subr.bf16.mxu0 0
        %1389 = vmatpush1.bf16.msra.mxu0 0
        %1390 = vmatprep.subr.bf16.mxu0 0
        %1391 = vmatpush1.bf16.msra.mxu0 0
        %1392 = vmatprep.subr.bf16.mxu0 0
        %1393 = vmatpush1.bf16.msra.mxu0 0
        %1394 = vmatprep.mubr.bf16.mxu0 0
        %1395 = vmatmul.mubr.bf16.gmra.mrb[0].mxu0 %v1360
        %v1396 = vpop.f32.mrb[0].mxu0
        %v1397 = vadd.f32 0.0, %v1396
        %v1398 = vpop.f32.mrb[0].mxu0
        %v1399 = vpop.f32.mrb[0].mxu0
        %v1400 = vpop.f32.mrb[0].mxu0
        %1401 = vdwg.mxu0
        %1403 = vrot.lane.b32.xlu0 %v864, 112
        %v1404 = vpop.permute.xlu0 %1403
        %v1407 = vsel %vm871, %v1348, 0
        %1409 = vmatprep.subr.bf16.mxu0 0
        %1410 = vmatpush1.bf16.msra.mxu0 %v1404
        %1411 = vmatprep.subr.bf16.mxu0 0
        %1412 = vmatpush1.bf16.msra.mxu0 0
        %1413 = vmatprep.subr.bf16.mxu0 0
        %1414 = vmatpush1.bf16.msra.mxu0 0
        %1415 = vmatprep.subr.bf16.mxu0 0
        %1416 = vmatpush1.bf16.msra.mxu0 0
        %1417 = vmatprep.subr.bf16.mxu0 0
        %1418 = vmatpush1.bf16.msra.mxu0 0
        %1419 = vmatprep.subr.bf16.mxu0 0
        %1420 = vmatpush1.bf16.msra.mxu0 0
        %1421 = vmatprep.subr.bf16.mxu0 0
        %1422 = vmatpush1.bf16.msra.mxu0 0
        %1423 = vmatprep.subr.bf16.mxu0 0
        %1424 = vmatpush1.bf16.msra.mxu0 0
        %1425 = vmatprep.subr.bf16.mxu0 0
        %1426 = vmatpush1.bf16.msra.mxu0 0
        %1427 = vmatprep.subr.bf16.mxu0 0
        %1428 = vmatpush1.bf16.msra.mxu0 0
        %1429 = vmatprep.subr.bf16.mxu0 0
        %1430 = vmatpush1.bf16.msra.mxu0 0
        %1431 = vmatprep.subr.bf16.mxu0 0
        %1432 = vmatpush1.bf16.msra.mxu0 0
        %1433 = vmatprep.subr.bf16.mxu0 0
        %1434 = vmatpush1.bf16.msra.mxu0 0
        %1435 = vmatprep.subr.bf16.mxu0 0
        %1436 = vmatpush1.bf16.msra.mxu0 0
        %1437 = vmatprep.subr.bf16.mxu0 0
        %1438 = vmatpush1.bf16.msra.mxu0 0
        %1439 = vmatprep.subr.bf16.mxu0 0
        %1440 = vmatpush1.bf16.msra.mxu0 0
        %1441 = vmatprep.mubr.bf16.mxu0 0
        %1442 = vmatmul.mubr.bf16.gmra.mrb[0].mxu0 %v1407
        %v1443 = vpop.f32.mrb[0].mxu0
        %v1444 = vadd.f32 0.0, %v1443
        %v1445 = vpop.f32.mrb[0].mxu0
        %v1446 = vpop.f32.mrb[0].mxu0
        %v1447 = vpop.f32.mrb[0].mxu0
        %1448 = vdwg.mxu0
        %1450 = vrot.lane.b32.xlu0 %v865, 112
        %v1451 = vpop.permute.xlu0 %1450
        %v1454 = vsel %vm871, %v1349, 0
        %1456 = vmatprep.subr.bf16.mxu0 0
        %1457 = vmatpush1.bf16.msra.mxu0 %v1451
        %1458 = vmatprep.subr.bf16.mxu0 0
        %1459 = vmatpush1.bf16.msra.mxu0 0
        %1460 = vmatprep.subr.bf16.mxu0 0
        %1461 = vmatpush1.bf16.msra.mxu0 0
        %1462 = vmatprep.subr.bf16.mxu0 0
        %1463 = vmatpush1.bf16.msra.mxu0 0
        %1464 = vmatprep.subr.bf16.mxu0 0
        %1465 = vmatpush1.bf16.msra.mxu0 0
        %1466 = vmatprep.subr.bf16.mxu0 0
        %1467 = vmatpush1.bf16.msra.mxu0 0
        %1468 = vmatprep.subr.bf16.mxu0 0
        %1469 = vmatpush1.bf16.msra.mxu0 0
        %1470 = vmatprep.subr.bf16.mxu0 0
        %1471 = vmatpush1.bf16.msra.mxu0 0
        %1472 = vmatprep.subr.bf16.mxu0 0
        %1473 = vmatpush1.bf16.msra.mxu0 0
        %1474 = vmatprep.subr.bf16.mxu0 0
        %1475 = vmatpush1.bf16.msra.mxu0 0
        %1476 = vmatprep.subr.bf16.mxu0 0
        %1477 = vmatpush1.bf16.msra.mxu0 0
        %1478 = vmatprep.subr.bf16.mxu0 0
        %1479 = vmatpush1.bf16.msra.mxu0 0
        %1480 = vmatprep.subr.bf16.mxu0 0
        %1481 = vmatpush1.bf16.msra.mxu0 0
        %1482 = vmatprep.subr.bf16.mxu0 0
        %1483 = vmatpush1.bf16.msra.mxu0 0
        %1484 = vmatprep.subr.bf16.mxu0 0
        %1485 = vmatpush1.bf16.msra.mxu0 0
        %1486 = vmatprep.subr.bf16.mxu0 0
        %1487 = vmatpush1.bf16.msra.mxu0 0
        %1488 = vmatprep.mubr.bf16.mxu0 0
        %1489 = vmatmul.mubr.bf16.gmra.mrb[0].mxu0 %v1454
        %v1490 = vpop.f32.mrb[0].mxu0
        %v1491 = vadd.f32 0.0, %v1490
        %v1492 = vpop.f32.mrb[0].mxu0
        %v1493 = vpop.f32.mrb[0].mxu0
        %v1494 = vpop.f32.mrb[0].mxu0
        %1495 = vdwg.mxu0
        %1497 = vrot.lane.b32.xlu0 %v866, 112
        %v1498 = vpop.permute.xlu0 %1497
        %v1501 = vsel %vm871, %v1350, 0
        %1503 = vmatprep.subr.bf16.mxu0 0
        %1504 = vmatpush1.bf16.msra.mxu0 %v1498
        %1505 = vmatprep.subr.bf16.mxu0 0
        %1506 = vmatpush1.bf16.msra.mxu0 0
        %1507 = vmatprep.subr.bf16.mxu0 0
        %1508 = vmatpush1.bf16.msra.mxu0 0
        %1509 = vmatprep.subr.bf16.mxu0 0
        %1510 = vmatpush1.bf16.msra.mxu0 0
        %1511 = vmatprep.subr.bf16.mxu0 0
        %1512 = vmatpush1.bf16.msra.mxu0 0
        %1513 = vmatprep.subr.bf16.mxu0 0
        %1514 = vmatpush1.bf16.msra.mxu0 0
        %1515 = vmatprep.subr.bf16.mxu0 0
        %1516 = vmatpush1.bf16.msra.mxu0 0
        %1517 = vmatprep.subr.bf16.mxu0 0
        %1518 = vmatpush1.bf16.msra.mxu0 0
        %1519 = vmatprep.subr.bf16.mxu0 0
        %1520 = vmatpush1.bf16.msra.mxu0 0
        %1521 = vmatprep.subr.bf16.mxu0 0
        %1522 = vmatpush1.bf16.msra.mxu0 0
        %1523 = vmatprep.subr.bf16.mxu0 0
        %1524 = vmatpush1.bf16.msra.mxu0 0
        %1525 = vmatprep.subr.bf16.mxu0 0
        %1526 = vmatpush1.bf16.msra.mxu0 0
        %1527 = vmatprep.subr.bf16.mxu0 0
        %1528 = vmatpush1.bf16.msra.mxu0 0
        %1529 = vmatprep.subr.bf16.mxu0 0
        %1530 = vmatpush1.bf16.msra.mxu0 0
        %1531 = vmatprep.subr.bf16.mxu0 0
        %1532 = vmatpush1.bf16.msra.mxu0 0
        %1533 = vmatprep.subr.bf16.mxu0 0
        %1534 = vmatpush1.bf16.msra.mxu0 0
        %1535 = vmatprep.mubr.bf16.mxu0 0
        %1536 = vmatmul.mubr.bf16.gmra.mrb[0].mxu0 %v1501
        %v1537 = vpop.f32.mrb[0].mxu0
        %v1538 = vadd.f32 0.0, %v1537
        %v1539 = vpop.f32.mrb[0].mxu0
        %v1540 = vpop.f32.mrb[0].mxu0
        %v1541 = vpop.f32.mrb[0].mxu0
        %1542 = vdwg.mxu0
        %1544 = vrot.lane.b32.xlu0 %v867, 112
        %v1545 = vpop.permute.xlu0 %1544
        %v1548 = vsel %vm871, %v1351, 0
        %1550 = vmatprep.subr.bf16.mxu0 0
        %1551 = vmatpush1.bf16.msra.mxu0 %v1545
        %1552 = vmatprep.subr.bf16.mxu0 0
        %1553 = vmatpush1.bf16.msra.mxu0 0
        %1554 = vmatprep.subr.bf16.mxu0 0
        %1555 = vmatpush1.bf16.msra.mxu0 0
        %1556 = vmatprep.subr.bf16.mxu0 0
        %1557 = vmatpush1.bf16.msra.mxu0 0
        %1558 = vmatprep.subr.bf16.mxu0 0
        %1559 = vmatpush1.bf16.msra.mxu0 0
        %1560 = vmatprep.subr.bf16.mxu0 0
        %1561 = vmatpush1.bf16.msra.mxu0 0
        %1562 = vmatprep.subr.bf16.mxu0 0
        %1563 = vmatpush1.bf16.msra.mxu0 0
        %1564 = vmatprep.subr.bf16.mxu0 0
        %1565 = vmatpush1.bf16.msra.mxu0 0
        %1566 = vmatprep.subr.bf16.mxu0 0
        %1567 = vmatpush1.bf16.msra.mxu0 0
        %1568 = vmatprep.subr.bf16.mxu0 0
        %1569 = vmatpush1.bf16.msra.mxu0 0
        %1570 = vmatprep.subr.bf16.mxu0 0
        %1571 = vmatpush1.bf16.msra.mxu0 0
        %1572 = vmatprep.subr.bf16.mxu0 0
        %1573 = vmatpush1.bf16.msra.mxu0 0
        %1574 = vmatprep.subr.bf16.mxu0 0
        %1575 = vmatpush1.bf16.msra.mxu0 0
        %1576 = vmatprep.subr.bf16.mxu0 0
        %1577 = vmatpush1.bf16.msra.mxu0 0
        %1578 = vmatprep.subr.bf16.mxu0 0
        %1579 = vmatpush1.bf16.msra.mxu0 0
        %1580 = vmatprep.subr.bf16.mxu0 0
        %1581 = vmatpush1.bf16.msra.mxu0 0
        %1582 = vmatprep.mubr.bf16.mxu0 0
        %1583 = vmatmul.mubr.bf16.gmra.mrb[0].mxu0 %v1548
        %v1584 = vpop.f32.mrb[0].mxu0
        %v1585 = vadd.f32 0.0, %v1584
        %v1586 = vpop.f32.mrb[0].mxu0
        %v1587 = vpop.f32.mrb[0].mxu0
        %v1588 = vpop.f32.mrb[0].mxu0
        %1589 = vdwg.mxu0
        %1591 = vrot.lane.b32.xlu0 %v868, 112
        %v1592 = vpop.permute.xlu0 %1591
        %v1595 = vsel %vm871, %v1352, 0
        %1597 = vmatprep.subr.bf16.mxu0 0
        %1598 = vmatpush1.bf16.msra.mxu0 %v1592
        %1599 = vmatprep.subr.bf16.mxu0 0
        %1600 = vmatpush1.bf16.msra.mxu0 0
        %1601 = vmatprep.subr.bf16.mxu0 0
        %1602 = vmatpush1.bf16.msra.mxu0 0
        %1603 = vmatprep.subr.bf16.mxu0 0
        %1604 = vmatpush1.bf16.msra.mxu0 0
        %1605 = vmatprep.subr.bf16.mxu0 0
        %1606 = vmatpush1.bf16.msra.mxu0 0
        %1607 = vmatprep.subr.bf16.mxu0 0
        %1608 = vmatpush1.bf16.msra.mxu0 0
        %1609 = vmatprep.subr.bf16.mxu0 0
        %1610 = vmatpush1.bf16.msra.mxu0 0
        %1611 = vmatprep.subr.bf16.mxu0 0
        %1612 = vmatpush1.bf16.msra.mxu0 0
        %1613 = vmatprep.subr.bf16.mxu0 0
        %1614 = vmatpush1.bf16.msra.mxu0 0
        %1615 = vmatprep.subr.bf16.mxu0 0
        %1616 = vmatpush1.bf16.msra.mxu0 0
        %1617 = vmatprep.subr.bf16.mxu0 0
        %1618 = vmatpush1.bf16.msra.mxu0 0
        %1619 = vmatprep.subr.bf16.mxu0 0
        %1620 = vmatpush1.bf16.msra.mxu0 0
        %1621 = vmatprep.subr.bf16.mxu0 0
        %1622 = vmatpush1.bf16.msra.mxu0 0
        %1623 = vmatprep.subr.bf16.mxu0 0
        %1624 = vmatpush1.bf16.msra.mxu0 0
        %1625 = vmatprep.subr.bf16.mxu0 0
        %1626 = vmatpush1.bf16.msra.mxu0 0
        %1627 = vmatprep.subr.bf16.mxu0 0
        %1628 = vmatpush1.bf16.msra.mxu0 0
        %1629 = vmatprep.mubr.bf16.mxu0 0
        %1630 = vmatmul.mubr.bf16.gmra.mrb[0].mxu0 %v1595
        %v1631 = vpop.f32.mrb[0].mxu0
        %v1632 = vadd.f32 0.0, %v1631
        %v1633 = vpop.f32.mrb[0].mxu0
        %v1634 = vpop.f32.mrb[0].mxu0
        %v1635 = vpop.f32.mrb[0].mxu0
        %1636 = vdwg.mxu0
        %1638 = vrot.lane.b32.xlu0 %v869, 112
        %v1639 = vpop.permute.xlu0 %1638
        %v1642 = vsel %vm871, %v1353, 0
        %1644 = vmatprep.subr.bf16.mxu0 0
        %1645 = vmatpush1.bf16.msra.mxu0 %v1639
        %1646 = vmatprep.subr.bf16.mxu0 0
        %1647 = vmatpush1.bf16.msra.mxu0 0
        %1648 = vmatprep.subr.bf16.mxu0 0
        %1649 = vmatpush1.bf16.msra.mxu0 0
        %1650 = vmatprep.subr.bf16.mxu0 0
        %1651 = vmatpush1.bf16.msra.mxu0 0
        %1652 = vmatprep.subr.bf16.mxu0 0
        %1653 = vmatpush1.bf16.msra.mxu0 0
        %1654 = vmatprep.subr.bf16.mxu0 0
        %1655 = vmatpush1.bf16.msra.mxu0 0
        %1656 = vmatprep.subr.bf16.mxu0 0
        %1657 = vmatpush1.bf16.msra.mxu0 0
        %1658 = vmatprep.subr.bf16.mxu0 0
        %1659 = vmatpush1.bf16.msra.mxu0 0
        %1660 = vmatprep.subr.bf16.mxu0 0
        %1661 = vmatpush1.bf16.msra.mxu0 0
        %1662 = vmatprep.subr.bf16.mxu0 0
        %1663 = vmatpush1.bf16.msra.mxu0 0
        %1664 = vmatprep.subr.bf16.mxu0 0
        %1665 = vmatpush1.bf16.msra.mxu0 0
        %1666 = vmatprep.subr.bf16.mxu0 0
        %1667 = vmatpush1.bf16.msra.mxu0 0
        %1668 = vmatprep.subr.bf16.mxu0 0
        %1669 = vmatpush1.bf16.msra.mxu0 0
        %1670 = vmatprep.subr.bf16.mxu0 0
        %1671 = vmatpush1.bf16.msra.mxu0 0
        %1672 = vmatprep.subr.bf16.mxu0 0
        %1673 = vmatpush1.bf16.msra.mxu0 0
        %1674 = vmatprep.subr.bf16.mxu0 0
        %1675 = vmatpush1.bf16.msra.mxu0 0
        %1676 = vmatprep.mubr.bf16.mxu0 0
        %1677 = vmatmul.mubr.bf16.gmra.mrb[0].mxu0 %v1642
        %v1678 = vpop.f32.mrb[0].mxu0
        %v1679 = vadd.f32 0.0, %v1678
        %v1680 = vpop.f32.mrb[0].mxu0
        %v1681 = vpop.f32.mrb[0].mxu0
        %v1682 = vpop.f32.mrb[0].mxu0
        %1683 = vdwg.mxu0
        %1685 = vrot.lane.b32.xlu0 %v870, 112
        %v1686 = vpop.permute.xlu0 %1685
        %v1689 = vsel %vm871, %v1354, 0
        %1691 = vmatprep.subr.bf16.mxu0 0
        %1692 = vmatpush1.bf16.msra.mxu0 %v1686
        %1693 = vmatprep.subr.bf16.mxu0 0
        %1694 = vmatpush1.bf16.msra.mxu0 0
        %1695 = vmatprep.subr.bf16.mxu0 0
        %1696 = vmatpush1.bf16.msra.mxu0 0
        %1697 = vmatprep.subr.bf16.mxu0 0
        %1698 = vmatpush1.bf16.msra.mxu0 0
        %1699 = vmatprep.subr.bf16.mxu0 0
        %1700 = vmatpush1.bf16.msra.mxu0 0
        %1701 = vmatprep.subr.bf16.mxu0 0
        %1702 = vmatpush1.bf16.msra.mxu0 0
        %1703 = vmatprep.subr.bf16.mxu0 0
        %1704 = vmatpush1.bf16.msra.mxu0 0
        %1705 = vmatprep.subr.bf16.mxu0 0
        %1706 = vmatpush1.bf16.msra.mxu0 0
        %1707 = vmatprep.subr.bf16.mxu0 0
        %1708 = vmatpush1.bf16.msra.mxu0 0
        %1709 = vmatprep.subr.bf16.mxu0 0
        %1710 = vmatpush1.bf16.msra.mxu0 0
        %1711 = vmatprep.subr.bf16.mxu0 0
        %1712 = vmatpush1.bf16.msra.mxu0 0
        %1713 = vmatprep.subr.bf16.mxu0 0
        %1714 = vmatpush1.bf16.msra.mxu0 0
        %1715 = vmatprep.subr.bf16.mxu0 0
        %1716 = vmatpush1.bf16.msra.mxu0 0
        %1717 = vmatprep.subr.bf16.mxu0 0
        %1718 = vmatpush1.bf16.msra.mxu0 0
        %1719 = vmatprep.subr.bf16.mxu0 0
        %1720 = vmatpush1.bf16.msra.mxu0 0
        %1721 = vmatprep.subr.bf16.mxu0 0
        %1722 = vmatpush1.bf16.msra.mxu0 0
        %1723 = vmatprep.mubr.bf16.mxu0 0
        %1724 = vmatmul.mubr.bf16.gmra.mrb[0].mxu0 %v1689
        %v1725 = vpop.f32.mrb[0].mxu0
        %v1726 = vadd.f32 0.0, %v1725
        %v1727 = vpop.f32.mrb[0].mxu0
        %v1728 = vpop.f32.mrb[0].mxu0
        %v1729 = vpop.f32.mrb[0].mxu0
        %1730 = vdwg.mxu0
        %v1731 = vadd.f32 %v1397, 0.0
        %v1732 = vadd.f32 %v1444, 0.0
        %v1733 = vadd.f32 %v1491, 0.0
        %v1734 = vadd.f32 %v1538, 0.0
        %v1735 = vadd.f32 %v1585, 0.0
        %v1736 = vadd.f32 %v1632, 0.0
        %v1737 = vadd.f32 %v1679, 0.0
        %v1738 = vadd.f32 %v1726, 0.0
        %v1739 = vlaneseq
        %v1740 = vshrl.u32 %v1739, 7
        %v1741 = vsub.s32 0, %v1740
        %v1742 = vrot.slane %v821, %v1741
        %v1743 = vlaneseq
        %v1744 = vshrl.u32 %v1743, 7
        %v1745 = vsub.s32 0, %v1744
        %v1746 = vrot.slane %v835, %v1745
        %v1747 = vlaneseq
        %v1748 = vshrl.u32 %v1747, 7
        %v1749 = vsub.s32 0, %v1748
        %v1750 = vrot.slane %v843, %v1749
        %v1751 = vlaneseq
        %v1752 = vshrl.u32 %v1751, 7
        %v1753 = vsub.s32 0, %v1752
        %v1754 = vrot.slane %v845, %v1753
        %v1755 = vlaneseq
        %v1756 = vshrl.u32 %v1755, 7
        %v1757 = vsub.s32 0, %v1756
        %v1758 = vrot.slane %v828, %v1757
        %v1759 = vlaneseq
        %v1760 = vshrl.u32 %v1759, 7
        %v1761 = vsub.s32 0, %v1760
        %v1762 = vrot.slane %v842, %v1761
        %v1763 = vlaneseq
        %v1764 = vshrl.u32 %v1763, 7
        %v1765 = vsub.s32 0, %v1764
        %v1766 = vrot.slane %v844, %v1765
        %v1767 = vlaneseq
        %v1768 = vshrl.u32 %v1767, 7
        %v1769 = vsub.s32 0, %v1768
        %v1770 = vrot.slane %v846, %v1769
        %1781 = vrot.lane.b32.xlu0 %v590, 96
        %v1782 = vpop.permute.xlu0 %1781
        %1783 = vrot.lane.b32.xlu0 %v591, 96
        %v1784 = vpop.permute.xlu0 %1783
        %v1787 = vmul.f32 %v1742, %v1782
        %v1788 = vmul.f32 %v1742, %v1784
        %v1789 = vmul.f32 %v1746, %v1782
        %v1790 = vmul.f32 %v1746, %v1784
        %v1791 = vmul.f32 %v1750, %v1782
        %v1792 = vmul.f32 %v1750, %v1784
        %v1793 = vmul.f32 %v1754, %v1782
        %v1794 = vmul.f32 %v1754, %v1784
        %v1795 = vmul.f32 %v1758, %v1782
        %v1796 = vmul.f32 %v1758, %v1784
        %v1797 = vmul.f32 %v1762, %v1782
        %v1798 = vmul.f32 %v1762, %v1784
        %v1799 = vmul.f32 %v1766, %v1782
        %v1800 = vmul.f32 %v1766, %v1784
        %v1801 = vmul.f32 %v1770, %v1782
        %v1802 = vmul.f32 %v1770, %v1784
        %1819 = vrot.lane.b32.xlu0 %v731, 112
        %v1820 = vpop.permute.xlu0 %1819
        %1821 = vrot.lane.b32.xlu0 %v734, 112
        %v1822 = vpop.permute.xlu0 %1821
        %1823 = vrot.lane.b32.xlu0 %v739, 112
        %v1824 = vpop.permute.xlu0 %1823
        %1825 = vrot.lane.b32.xlu0 %v742, 112
        %v1826 = vpop.permute.xlu0 %1825
        %1827 = vrot.lane.b32.xlu0 %v747, 112
        %v1828 = vpop.permute.xlu0 %1827
        %1829 = vrot.lane.b32.xlu0 %v750, 112
        %v1830 = vpop.permute.xlu0 %1829
        %1831 = vrot.lane.b32.xlu0 %v755, 112
        %v1832 = vpop.permute.xlu0 %1831
        %1833 = vrot.lane.b32.xlu0 %v758, 112
        %v1834 = vpop.permute.xlu0 %1833
        %1835 = vrot.lane.b32.xlu0 %v763, 112
        %v1836 = vpop.permute.xlu0 %1835
        %1837 = vrot.lane.b32.xlu0 %v766, 112
        %v1838 = vpop.permute.xlu0 %1837
        %1839 = vrot.lane.b32.xlu0 %v771, 112
        %v1840 = vpop.permute.xlu0 %1839
        %1841 = vrot.lane.b32.xlu0 %v774, 112
        %v1842 = vpop.permute.xlu0 %1841
        %1843 = vrot.lane.b32.xlu0 %v779, 112
        %v1844 = vpop.permute.xlu0 %1843
        %1845 = vrot.lane.b32.xlu0 %v782, 112
        %v1846 = vpop.permute.xlu0 %1845
        %1847 = vrot.lane.b32.xlu0 %v787, 112
        %v1848 = vpop.permute.xlu0 %1847
        %1849 = vrot.lane.b32.xlu0 %v790, 112
        %v1850 = vpop.permute.xlu0 %1849
        %v1867 = vadd.f32 %v1787, %v1820
        %v1868 = vadd.f32 %v1788, %v1822
        %v1869 = vadd.f32 %v1789, %v1824
        %v1870 = vadd.f32 %v1790, %v1826
        %v1871 = vadd.f32 %v1791, %v1828
        %v1872 = vadd.f32 %v1792, %v1830
        %v1873 = vadd.f32 %v1793, %v1832
        %v1874 = vadd.f32 %v1794, %v1834
        %v1875 = vadd.f32 %v1795, %v1836
        %v1876 = vadd.f32 %v1796, %v1838
        %v1877 = vadd.f32 %v1797, %v1840
        %v1878 = vadd.f32 %v1798, %v1842
        %v1879 = vadd.f32 %v1799, %v1844
        %v1880 = vadd.f32 %v1800, %v1846
        %v1881 = vadd.f32 %v1801, %v1848
        %v1882 = vadd.f32 %v1802, %v1850
        %v1884 = vcombine.high %v793, %v793
        %v1886 = vunpack.c.l.s4 1966171168
        %v1887 = vunpack.c.0.s8 %v1886
        %v1888 = vlaneseq
        %v1889 = vshrl.u32 %v1888, 7
        %v1890 = vsub.s32 %v1887, %v1889
        %v1891 = vrot.slane %v793, %v1890
        %v1893 = vunpack.c.l.s4 1966171168
        %v1894 = vunpack.c.0.s8 %v1893
        %v1895 = vlaneseq
        %v1896 = vshrl.u32 %v1895, 7
        %v1897 = vsub.s32 %v1894, %v1896
        %v1898 = vrot.slane %v1884, %v1897
        %v1899 = vcombine.high %v1891, %v1891
        %v1900 = vcombine.high %v1898, %v1898
        %v1902 = vunpack.c.l.s4 1966171168
        %v1903 = vunpack.c.0.s8 %v1902
        %v1904 = vlaneseq
        %v1905 = vshrl.u32 %v1904, 7
        %v1906 = vsub.s32 %v1903, %v1905
        %v1907 = vrot.slane %v1891, %v1906
        %v1909 = vunpack.c.l.s4 1966171168
        %v1910 = vunpack.c.0.s8 %v1909
        %v1911 = vlaneseq
        %v1912 = vshrl.u32 %v1911, 7
        %v1913 = vsub.s32 %v1910, %v1912
        %v1914 = vrot.slane %v1898, %v1913
        %v1916 = vunpack.c.l.s4 1966171168
        %v1917 = vunpack.c.0.s8 %v1916
        %v1918 = vlaneseq
        %v1919 = vshrl.u32 %v1918, 7
        %v1920 = vsub.s32 %v1917, %v1919
        %v1921 = vrot.slane %v1899, %v1920
        %v1923 = vunpack.c.l.s4 1966171168
        %v1924 = vunpack.c.0.s8 %v1923
        %v1925 = vlaneseq
        %v1926 = vshrl.u32 %v1925, 7
        %v1927 = vsub.s32 %v1924, %v1926
        %v1928 = vrot.slane %v1900, %v1927
        %v1929 = vcombine.high %v1907, %v1907
        %v1930 = vcombine.high %v1914, %v1914
        %v1931 = vcombine.high %v1921, %v1921
        %v1932 = vcombine.high %v1928, %v1928
        %v1933 = vlaneseq
        %v1934 = vshrl.u32 %v1933, 7
        %v1935 = vsub.s32 0, %v1934
        %v1936 = vrot.slane %v794, %v1935
        %1938 = vbcast.lane.b32.xlu0 %v1936, 256
        %v1939 = vpop.permute.xlu0 %1938
        %s1941 = sor.u32 256, 8
        %1942 = vbcast.lane.b32.xlu0 %v1936, %s1941
        %v1943 = vpop.permute.xlu0 %1942
        %v1944 = vlaneseq
        %v1945 = vshrl.u32 %v1944, 7
        %v1946 = vsub.s32 0, %v1945
        %v1947 = vrot.slane %v1907, %v1946
        %v1948 = vlaneseq
        %v1949 = vshrl.u32 %v1948, 7
        %v1950 = vsub.s32 0, %v1949
        %v1951 = vrot.slane %v1921, %v1950
        %v1952 = vlaneseq
        %v1953 = vshrl.u32 %v1952, 7
        %v1954 = vsub.s32 0, %v1953
        %v1955 = vrot.slane %v1929, %v1954
        %v1956 = vlaneseq
        %v1957 = vshrl.u32 %v1956, 7
        %v1958 = vsub.s32 0, %v1957
        %v1959 = vrot.slane %v1931, %v1958
        %v1960 = vlaneseq
        %v1961 = vshrl.u32 %v1960, 7
        %v1962 = vsub.s32 0, %v1961
        %v1963 = vrot.slane %v1914, %v1962
        %v1964 = vlaneseq
        %v1965 = vshrl.u32 %v1964, 7
        %v1966 = vsub.s32 0, %v1965
        %v1967 = vrot.slane %v1928, %v1966
        %v1968 = vlaneseq
        %v1969 = vshrl.u32 %v1968, 7
        %v1970 = vsub.s32 0, %v1969
        %v1971 = vrot.slane %v1930, %v1970
        %v1972 = vlaneseq
        %v1973 = vshrl.u32 %v1972, 7
        %v1974 = vsub.s32 0, %v1973
        %v1975 = vrot.slane %v1932, %v1974
        %v1984 = vmul.f32 %v1947, %v1939
        %v1985 = vmul.f32 %v1947, %v1943
        %v1986 = vmul.f32 %v1951, %v1939
        %v1987 = vmul.f32 %v1951, %v1943
        %v1988 = vmul.f32 %v1955, %v1939
        %v1989 = vmul.f32 %v1955, %v1943
        %v1990 = vmul.f32 %v1959, %v1939
        %v1991 = vmul.f32 %v1959, %v1943
        %v1992 = vmul.f32 %v1963, %v1939
        %v1993 = vmul.f32 %v1963, %v1943
        %v1994 = vmul.f32 %v1967, %v1939
        %v1995 = vmul.f32 %v1967, %v1943
        %v1996 = vmul.f32 %v1971, %v1939
        %v1997 = vmul.f32 %v1971, %v1943
        %v1998 = vmul.f32 %v1975, %v1939
        %v1999 = vmul.f32 %v1975, %v1943
        %2001 = vset.pattern.permute.xlu0 0
        %2002 = vperm.xlu0 %2001, %v1984
        %v2003 = vpop.permute.xlu0 %2002
        %2006 = vset.pattern.permute.xlu0 0
        %2007 = vperm.xlu0 %2006, %v1985
        %v2008 = vpop.permute.xlu0 %2007
        %2011 = vset.pattern.permute.xlu0 0
        %2012 = vperm.xlu0 %2011, %v1986
        %v2013 = vpop.permute.xlu0 %2012
        %2016 = vset.pattern.permute.xlu0 0
        %2017 = vperm.xlu0 %2016, %v1987
        %v2018 = vpop.permute.xlu0 %2017
        %2021 = vset.pattern.permute.xlu0 0
        %2022 = vperm.xlu0 %2021, %v1988
        %v2023 = vpop.permute.xlu0 %2022
        %2026 = vset.pattern.permute.xlu0 0
        %2027 = vperm.xlu0 %2026, %v1989
        %v2028 = vpop.permute.xlu0 %2027
        %2031 = vset.pattern.permute.xlu0 0
        %2032 = vperm.xlu0 %2031, %v1990
        %v2033 = vpop.permute.xlu0 %2032
        %2036 = vset.pattern.permute.xlu0 0
        %2037 = vperm.xlu0 %2036, %v1991
        %v2038 = vpop.permute.xlu0 %2037
        %2041 = vset.pattern.permute.xlu0 0
        %2042 = vperm.xlu0 %2041, %v1992
        %v2043 = vpop.permute.xlu0 %2042
        %2046 = vset.pattern.permute.xlu0 0
        %2047 = vperm.xlu0 %2046, %v1993
        %v2048 = vpop.permute.xlu0 %2047
        %2051 = vset.pattern.permute.xlu0 0
        %2052 = vperm.xlu0 %2051, %v1994
        %v2053 = vpop.permute.xlu0 %2052
        %2056 = vset.pattern.permute.xlu0 0
        %2057 = vperm.xlu0 %2056, %v1995
        %v2058 = vpop.permute.xlu0 %2057
        %2061 = vset.pattern.permute.xlu0 0
        %2062 = vperm.xlu0 %2061, %v1996
        %v2063 = vpop.permute.xlu0 %2062
        %2066 = vset.pattern.permute.xlu0 0
        %2067 = vperm.xlu0 %2066, %v1997
        %v2068 = vpop.permute.xlu0 %2067
        %2071 = vset.pattern.permute.xlu0 0
        %2072 = vperm.xlu0 %2071, %v1998
        %v2073 = vpop.permute.xlu0 %2072
        %2076 = vset.pattern.permute.xlu0 0
        %2077 = vperm.xlu0 %2076, %v1999
        %v2078 = vpop.permute.xlu0 %2077
        %v2080 = vmul.f32 %v1867, %v2003
        %v2081 = vmul.f32 %v1868, %v2008
        %v2082 = vmul.f32 %v1869, %v2013
        %v2083 = vmul.f32 %v1870, %v2018
        %v2084 = vmul.f32 %v1871, %v2023
        %v2085 = vmul.f32 %v1872, %v2028
        %v2086 = vmul.f32 %v1873, %v2033
        %v2087 = vmul.f32 %v1874, %v2038
        %v2088 = vmul.f32 %v1875, %v2043
        %v2089 = vmul.f32 %v1876, %v2048
        %v2090 = vmul.f32 %v1877, %v2053
        %v2091 = vmul.f32 %v1878, %v2058
        %v2092 = vmul.f32 %v1879, %v2063
        %v2093 = vmul.f32 %v1880, %v2068
        %v2094 = vmul.f32 %v1881, %v2073
        %v2095 = vmul.f32 %v1882, %v2078
        %2112 = vrot.lane.b32.xlu0 %v2080, 112
        %v2113 = vpop.permute.xlu0 %2112
        %2114 = vrot.lane.b32.xlu0 %v2081, 112
        %v2115 = vpop.permute.xlu0 %2114
        %2116 = vrot.lane.b32.xlu0 %v2082, 112
        %v2117 = vpop.permute.xlu0 %2116
        %2118 = vrot.lane.b32.xlu0 %v2083, 112
        %v2119 = vpop.permute.xlu0 %2118
        %2120 = vrot.lane.b32.xlu0 %v2084, 112
        %v2121 = vpop.permute.xlu0 %2120
        %2122 = vrot.lane.b32.xlu0 %v2085, 112
        %v2123 = vpop.permute.xlu0 %2122
        %2124 = vrot.lane.b32.xlu0 %v2086, 112
        %v2125 = vpop.permute.xlu0 %2124
        %2126 = vrot.lane.b32.xlu0 %v2087, 112
        %v2127 = vpop.permute.xlu0 %2126
        %2128 = vrot.lane.b32.xlu0 %v2088, 112
        %v2129 = vpop.permute.xlu0 %2128
        %2130 = vrot.lane.b32.xlu0 %v2089, 112
        %v2131 = vpop.permute.xlu0 %2130
        %2132 = vrot.lane.b32.xlu0 %v2090, 112
        %v2133 = vpop.permute.xlu0 %2132
        %2134 = vrot.lane.b32.xlu0 %v2091, 112
        %v2135 = vpop.permute.xlu0 %2134
        %2136 = vrot.lane.b32.xlu0 %v2092, 112
        %v2137 = vpop.permute.xlu0 %2136
        %2138 = vrot.lane.b32.xlu0 %v2093, 112
        %v2139 = vpop.permute.xlu0 %2138
        %2140 = vrot.lane.b32.xlu0 %v2094, 112
        %v2141 = vpop.permute.xlu0 %2140
        %2142 = vrot.lane.b32.xlu0 %v2095, 112
        %v2143 = vpop.permute.xlu0 %2142
        %2160 = vst.msk [vmem:[%s502] sm:$0xff] %vm871, %v2113
        %2161 = vst.msk [vmem:[%s502 + $0x8] sm:$0xff] %vm871, %v2115
        %2162 = vst.msk [vmem:[%s502 + $0x10] sm:$0xff] %vm871, %v2117
        %2163 = vst.msk [vmem:[%s502 + $0x18] sm:$0xff] %vm871, %v2119
        %2164 = vst.msk [vmem:[%s502 + $0x20] sm:$0xff] %vm871, %v2121
        %2165 = vst.msk [vmem:[%s502 + $0x28] sm:$0xff] %vm871, %v2123
        %2166 = vst.msk [vmem:[%s502 + $0x30] sm:$0xff] %vm871, %v2125
        %2167 = vst.msk [vmem:[%s502 + $0x38] sm:$0xff] %vm871, %v2127
        %2168 = vst.msk [vmem:[%s502 + $0x40] sm:$0xff] %vm871, %v2129
        %2169 = vst.msk [vmem:[%s502 + $0x48] sm:$0xff] %vm871, %v2131
        %2170 = vst.msk [vmem:[%s502 + $0x50] sm:$0xff] %vm871, %v2133
        %2171 = vst.msk [vmem:[%s502 + $0x58] sm:$0xff] %vm871, %v2135
        %2172 = vst.msk [vmem:[%s502 + $0x60] sm:$0xff] %vm871, %v2137
        %2173 = vst.msk [vmem:[%s502 + $0x68] sm:$0xff] %vm871, %v2139
        %2174 = vst.msk [vmem:[%s502 + $0x70] sm:$0xff] %vm871, %v2141
        %2175 = vst.msk [vmem:[%s502 + $0x78] sm:$0xff] %vm871, %v2143
        %v2176 = vlaneseq
        %v2177 = vshrl.u32 %v2176, 7
        %v2178 = vsub.s32 0, %v2177
        %v2179 = vrot.slane %v796, %v2178
        %2181 = vrot.lane.b32.xlu0 %v2179, 16
        %v2182 = vpop.permute.xlu0 %2181
        %v2184 = vmul.f32 %v2080, %v2182
        %v2185 = vmul.f32 %v2081, %v2182
        %v2186 = vmul.f32 %v2082, %v2182
        %v2187 = vmul.f32 %v2083, %v2182
        %v2188 = vmul.f32 %v2084, %v2182
        %v2189 = vmul.f32 %v2085, %v2182
        %v2190 = vmul.f32 %v2086, %v2182
        %v2191 = vmul.f32 %v2087, %v2182
        %v2192 = vmul.f32 %v2088, %v2182
        %v2193 = vmul.f32 %v2089, %v2182
        %v2194 = vmul.f32 %v2090, %v2182
        %v2195 = vmul.f32 %v2091, %v2182
        %v2196 = vmul.f32 %v2092, %v2182
        %v2197 = vmul.f32 %v2093, %v2182
        %v2198 = vmul.f32 %v2094, %v2182
        %v2199 = vmul.f32 %v2095, %v2182
        %2216 = vrot.lane.b32.xlu0 %v2184, 112
        %v2217 = vpop.permute.xlu0 %2216
        %2218 = vrot.lane.b32.xlu0 %v2185, 112
        %v2219 = vpop.permute.xlu0 %2218
        %2220 = vrot.lane.b32.xlu0 %v2186, 112
        %v2221 = vpop.permute.xlu0 %2220
        %2222 = vrot.lane.b32.xlu0 %v2187, 112
        %v2223 = vpop.permute.xlu0 %2222
        %2224 = vrot.lane.b32.xlu0 %v2188, 112
        %v2225 = vpop.permute.xlu0 %2224
        %2226 = vrot.lane.b32.xlu0 %v2189, 112
        %v2227 = vpop.permute.xlu0 %2226
        %2228 = vrot.lane.b32.xlu0 %v2190, 112
        %v2229 = vpop.permute.xlu0 %2228
        %2230 = vrot.lane.b32.xlu0 %v2191, 112
        %v2231 = vpop.permute.xlu0 %2230
        %2232 = vrot.lane.b32.xlu0 %v2192, 112
        %v2233 = vpop.permute.xlu0 %2232
        %2234 = vrot.lane.b32.xlu0 %v2193, 112
        %v2235 = vpop.permute.xlu0 %2234
        %2236 = vrot.lane.b32.xlu0 %v2194, 112
        %v2237 = vpop.permute.xlu0 %2236
        %2238 = vrot.lane.b32.xlu0 %v2195, 112
        %v2239 = vpop.permute.xlu0 %2238
        %2240 = vrot.lane.b32.xlu0 %v2196, 112
        %v2241 = vpop.permute.xlu0 %2240
        %2242 = vrot.lane.b32.xlu0 %v2197, 112
        %v2243 = vpop.permute.xlu0 %2242
        %2244 = vrot.lane.b32.xlu0 %v2198, 112
        %v2245 = vpop.permute.xlu0 %2244
        %2246 = vrot.lane.b32.xlu0 %v2199, 112
        %v2247 = vpop.permute.xlu0 %2246
        %v2264 = vsel %vm871, %v2217, 0.0
        %2265 = vadd.xlane.f32.xlu0 %v2264
        %v2266 = vpop.xlane.xlu0 %2265
        %v2267 = vsel %vm871, %v2219, 0.0
        %2268 = vadd.xlane.f32.xlu0 %v2267
        %v2269 = vpop.xlane.xlu0 %2268
        %v2270 = vsel %vm871, %v2221, 0.0
        %2271 = vadd.xlane.f32.xlu0 %v2270
        %v2272 = vpop.xlane.xlu0 %2271
        %v2273 = vsel %vm871, %v2223, 0.0
        %2274 = vadd.xlane.f32.xlu0 %v2273
        %v2275 = vpop.xlane.xlu0 %2274
        %v2276 = vsel %vm871, %v2225, 0.0
        %2277 = vadd.xlane.f32.xlu0 %v2276
        %v2278 = vpop.xlane.xlu0 %2277
        %v2279 = vsel %vm871, %v2227, 0.0
        %2280 = vadd.xlane.f32.xlu0 %v2279
        %v2281 = vpop.xlane.xlu0 %2280
        %v2282 = vsel %vm871, %v2229, 0.0
        %2283 = vadd.xlane.f32.xlu0 %v2282
        %v2284 = vpop.xlane.xlu0 %2283
        %v2285 = vsel %vm871, %v2231, 0.0
        %2286 = vadd.xlane.f32.xlu0 %v2285
        %v2287 = vpop.xlane.xlu0 %2286
        %v2288 = vsel %vm871, %v2233, 0.0
        %2289 = vadd.xlane.f32.xlu0 %v2288
        %v2290 = vpop.xlane.xlu0 %2289
        %v2291 = vsel %vm871, %v2235, 0.0
        %2292 = vadd.xlane.f32.xlu0 %v2291
        %v2293 = vpop.xlane.xlu0 %2292
        %v2294 = vsel %vm871, %v2237, 0.0
        %2295 = vadd.xlane.f32.xlu0 %v2294
        %v2296 = vpop.xlane.xlu0 %2295
        %v2297 = vsel %vm871, %v2239, 0.0
        %2298 = vadd.xlane.f32.xlu0 %v2297
        %v2299 = vpop.xlane.xlu0 %2298
        %v2300 = vsel %vm871, %v2241, 0.0
        %2301 = vadd.xlane.f32.xlu0 %v2300
        %v2302 = vpop.xlane.xlu0 %2301
        %v2303 = vsel %vm871, %v2243, 0.0
        %2304 = vadd.xlane.f32.xlu0 %v2303
        %v2305 = vpop.xlane.xlu0 %2304
        %v2306 = vsel %vm871, %v2245, 0.0
        %2307 = vadd.xlane.f32.xlu0 %v2306
        %v2308 = vpop.xlane.xlu0 %2307
        %v2309 = vsel %vm871, %v2247, 0.0
        %2310 = vadd.xlane.f32.xlu0 %v2309
        %v2311 = vpop.xlane.xlu0 %2310
        %v2312 = vpack.c.bf16 %v589, %v589
        %v2313 = vpack.c.bf16 %v591, %v590
        %2315 = vrot.lane.b32.xlu0 %v2312, 96
        %v2316 = vpop.permute.xlu0 %2315
        %2318 = vrot.lane.b32.xlu0 %v2313, 64
        %v2319 = vpop.permute.xlu0 %2318
        %v2321 = vsel %vm871, %v2316, 0
        %v2324 = vsel %vm871, %v2319, 0
        %2326 = vmatprep.subr.bf16.mxu0 0
        %2327 = vmatpush1.bf16.xpose.msra.mxu0 %v2324
        %2328 = vmatprep.subr.bf16.mxu0 0
        %2329 = vmatpush1.bf16.xpose.msra.mxu0 0
        %2330 = vmatprep.subr.bf16.mxu0 0
        %2331 = vmatpush1.bf16.xpose.msra.mxu0 0
        %2332 = vmatprep.subr.bf16.mxu0 0
        %2333 = vmatpush1.bf16.xpose.msra.mxu0 0
        %2334 = vmatprep.subr.bf16.mxu0 0
        %2335 = vmatpush1.bf16.xpose.msra.mxu0 0
        %2336 = vmatprep.subr.bf16.mxu0 0
        %2337 = vmatpush1.bf16.xpose.msra.mxu0 0
        %2338 = vmatprep.subr.bf16.mxu0 0
        %2339 = vmatpush1.bf16.xpose.msra.mxu0 0
        %2340 = vmatprep.subr.bf16.mxu0 0
        %2341 = vmatpush1.bf16.xpose.msra.mxu0 0
        %2342 = vmatprep.subr.bf16.mxu0 0
        %2343 = vmatpush1.bf16.xpose.msra.mxu0 0
        %2344 = vmatprep.subr.bf16.mxu0 0
        %2345 = vmatpush1.bf16.xpose.msra.mxu0 0
        %2346 = vmatprep.subr.bf16.mxu0 0
        %2347 = vmatpush1.bf16.xpose.msra.mxu0 0
        %2348 = vmatprep.subr.bf16.mxu0 0
        %2349 = vmatpush1.bf16.xpose.msra.mxu0 0
        %2350 = vmatprep.subr.bf16.mxu0 0
        %2351 = vmatpush1.bf16.xpose.msra.mxu0 0
        %2352 = vmatprep.subr.bf16.mxu0 0
        %2353 = vmatpush1.bf16.xpose.msra.mxu0 0
        %2354 = vmatprep.subr.bf16.mxu0 0
        %2355 = vmatpush1.bf16.xpose.msra.mxu0 0
        %2356 = vmatprep.subr.bf16.mxu0 0
        %2357 = vmatpush1.bf16.xpose.msra.mxu0 0
        %2358 = vmatprep.mubr.bf16.mxu0 0
        %2359 = vmatmul.mubr.bf16.gmra.mrb[0].mxu0 %v2321
        %v2360 = vpop.f32.mrb[0].mxu0
        %v2361 = vadd.f32 0.0, %v2360
        %v2362 = vpop.f32.mrb[0].mxu0
        %v2363 = vpop.f32.mrb[0].mxu0
        %v2364 = vpop.f32.mrb[0].mxu0
        %2365 = vdwg.mxu0
        %v2366 = vmul.f32 %v2361, 0.25
        %v2383 = vlaneseq
        %v2384 = vand.u32 %v2383, 127
        %v2385 = vlaneseq
        %v2386 = vshrl.u32 %v2385, 7
        %v2387 = vsub.s32 %v2384, %v2386
        %v2388 = vrot.slane %v2266, %v2387
        %v2389 = vadd.s32 %v2384, 4294967288
        %v2390 = vlaneseq
        %v2391 = vshrl.u32 %v2390, 7
        %v2392 = vsub.s32 %v2389, %v2391
        %v2393 = vrot.slane %v2269, %v2392
        %vm2394 = vcmask 130112
        %v2395 = vsel %vm2394, %v2393, %v2388
        %v2396 = vlaneseq
        %v2397 = vshrl.u32 %v2396, 7
        %v2398 = vsub.s32 %v2384, %v2397
        %v2399 = vrot.slane %v2272, %v2398
        %v2400 = vlaneseq
        %v2401 = vshrl.u32 %v2400, 7
        %v2402 = vsub.s32 %v2389, %v2401
        %v2403 = vrot.slane %v2275, %v2402
        %v2404 = vsel %vm2394, %v2403, %v2399
        %v2405 = vlaneseq
        %v2406 = vshrl.u32 %v2405, 7
        %v2407 = vsub.s32 %v2384, %v2406
        %v2408 = vrot.slane %v2278, %v2407
        %v2409 = vlaneseq
        %v2410 = vshrl.u32 %v2409, 7
        %v2411 = vsub.s32 %v2389, %v2410
        %v2412 = vrot.slane %v2281, %v2411
        %v2413 = vsel %vm2394, %v2412, %v2408
        %v2414 = vlaneseq
        %v2415 = vshrl.u32 %v2414, 7
        %v2416 = vsub.s32 %v2384, %v2415
        %v2417 = vrot.slane %v2284, %v2416
        %v2418 = vlaneseq
        %v2419 = vshrl.u32 %v2418, 7
        %v2420 = vsub.s32 %v2389, %v2419
        %v2421 = vrot.slane %v2287, %v2420
        %v2422 = vsel %vm2394, %v2421, %v2417
        %v2423 = vlaneseq
        %v2424 = vshrl.u32 %v2423, 7
        %v2425 = vsub.s32 %v2384, %v2424
        %v2426 = vrot.slane %v2290, %v2425
        %v2427 = vlaneseq
        %v2428 = vshrl.u32 %v2427, 7
        %v2429 = vsub.s32 %v2389, %v2428
        %v2430 = vrot.slane %v2293, %v2429
        %v2431 = vsel %vm2394, %v2430, %v2426
        %v2432 = vlaneseq
        %v2433 = vshrl.u32 %v2432, 7
        %v2434 = vsub.s32 %v2384, %v2433
        %v2435 = vrot.slane %v2296, %v2434
        %v2436 = vlaneseq
        %v2437 = vshrl.u32 %v2436, 7
        %v2438 = vsub.s32 %v2389, %v2437
        %v2439 = vrot.slane %v2299, %v2438
        %v2440 = vsel %vm2394, %v2439, %v2435
        %v2441 = vlaneseq
        %v2442 = vshrl.u32 %v2441, 7
        %v2443 = vsub.s32 %v2384, %v2442
        %v2444 = vrot.slane %v2302, %v2443
        %v2445 = vlaneseq
        %v2446 = vshrl.u32 %v2445, 7
        %v2447 = vsub.s32 %v2389, %v2446
        %v2448 = vrot.slane %v2305, %v2447
        %v2449 = vsel %vm2394, %v2448, %v2444
        %v2450 = vlaneseq
        %v2451 = vshrl.u32 %v2450, 7
        %v2452 = vsub.s32 %v2384, %v2451
        %v2453 = vrot.slane %v2308, %v2452
        %v2454 = vlaneseq
        %v2455 = vshrl.u32 %v2454, 7
        %v2456 = vsub.s32 %v2389, %v2455
        %v2457 = vrot.slane %v2311, %v2456
        %v2458 = vsel %vm2394, %v2457, %v2453
        %vm2459 = vcmask 1041409
        %v2460 = vsel %vm2459, %v2404, %v2395
        %vm2461 = vcmask 1042434
        %v2462 = vsel %vm2461, %v2413, %v2460
        %vm2463 = vcmask 1043459
        %v2464 = vsel %vm2463, %v2422, %v2462
        %vm2465 = vcmask 1044484
        %v2466 = vsel %vm2465, %v2431, %v2464
        %vm2467 = vcmask 1045509
        %v2468 = vsel %vm2467, %v2440, %v2466
        %vm2469 = vcmask 1046534
        %v2470 = vsel %vm2469, %v2449, %v2468
        %vm2471 = vcmask 1047559
        %v2472 = vsel %vm2471, %v2458, %v2470
        %v2474 = vadd.f32 %v2366, %v2472
        %v2475 = vlaneseq
        %v2476 = vshrl.u32 %v2475, 7
        %v2477 = vsub.s32 0, %v2476
        %v2478 = vrot.slane %v1248, %v2477
        %vm2479 = vcmp.eq.s32.totalorder %v2478, 1
        %v2480 = vsel %vm2479, %v2474, -1e+09
        %v2481 = vsel %vm871, %v2480, -inf
        %2482 = vmax.xlane.f32.xlu0 %v2481
        %v2483 = vpop.xlane.xlu0 %2482
        %v2484 = vsub.f32 %v2480, %v2483
        %v2485 = vmul.f32 %v2484, 1.442695
        %v2486 = vpow.pop %v2485
        %v2487 = vsel %vm871, %v2486, 0.0
        %2488 = vadd.xlane.f32.xlu0 %v2487
        %v2489 = vpop.xlane.xlu0 %2488
        %v2490 = vrcp.pop %v2489
        %v2491 = vmul.f32 %v2486, %v2490
        %v2492 = vpack.c.bf16 %v2491, %v2491
        %2493 = vrot.lane.b32.xlu0 %v2313, 48
        %v2494 = vpop.permute.xlu0 %2493
        %v2497 = vsel %vm871, %v2492, 0
        %2499 = vmatprep.subr.bf16.mxu0 0
        %2500 = vmatpush1.bf16.msra.mxu0 %v2494
        %2501 = vmatprep.subr.bf16.mxu0 0
        %2502 = vmatpush1.bf16.msra.mxu0 0
        %2503 = vmatprep.subr.bf16.mxu0 0
        %2504 = vmatpush1.bf16.msra.mxu0 0
        %2505 = vmatprep.subr.bf16.mxu0 0
        %2506 = vmatpush1.bf16.msra.mxu0 0
        %2507 = vmatprep.subr.bf16.mxu0 0
        %2508 = vmatpush1.bf16.msra.mxu0 0
        %2509 = vmatprep.subr.bf16.mxu0 0
        %2510 = vmatpush1.bf16.msra.mxu0 0
        %2511 = vmatprep.subr.bf16.mxu0 0
        %2512 = vmatpush1.bf16.msra.mxu0 0
        %2513 = vmatprep.subr.bf16.mxu0 0
        %2514 = vmatpush1.bf16.msra.mxu0 0
        %2515 = vmatprep.subr.bf16.mxu0 0
        %2516 = vmatpush1.bf16.msra.mxu0 0
        %2517 = vmatprep.subr.bf16.mxu0 0
        %2518 = vmatpush1.bf16.msra.mxu0 0
        %2519 = vmatprep.subr.bf16.mxu0 0
        %2520 = vmatpush1.bf16.msra.mxu0 0
        %2521 = vmatprep.subr.bf16.mxu0 0
        %2522 = vmatpush1.bf16.msra.mxu0 0
        %2523 = vmatprep.subr.bf16.mxu0 0
        %2524 = vmatpush1.bf16.msra.mxu0 0
        %2525 = vmatprep.subr.bf16.mxu0 0
        %2526 = vmatpush1.bf16.msra.mxu0 0
        %2527 = vmatprep.subr.bf16.mxu0 0
        %2528 = vmatpush1.bf16.msra.mxu0 0
        %2529 = vmatprep.subr.bf16.mxu0 0
        %2530 = vmatpush1.bf16.msra.mxu0 0
        %2531 = vmatprep.mubr.bf16.mxu0 0
        %2532 = vmatmul.mubr.bf16.gmra.mrb[0].mxu0 %v2497
        %v2533 = vpop.f32.mrb[0].mxu0
        %v2534 = vadd.f32 0.0, %v2533
        %v2535 = vpop.f32.mrb[0].mxu0
        %v2536 = vpop.f32.mrb[0].mxu0
        %v2537 = vpop.f32.mrb[0].mxu0
        %2538 = vdwg.mxu0
        %v2539 = vld [vmem:[%s6] sm:$0xf]
        %v2540 = vld [vmem:[%s6 + $0x4] sm:$0xf]
        %v2541 = vld [vmem:[%s6 + $0x8] sm:$0xf]
        %v2542 = vld [vmem:[%s6 + $0xc] sm:$0xf]
        %v2543 = vpack.c.bf16 %v1731, %v1731
        %v2544 = vpack.c.bf16 %v1732, %v1732
        %v2545 = vpack.c.bf16 %v1733, %v1733
        %v2546 = vpack.c.bf16 %v1734, %v1734
        %v2547 = vpack.c.bf16 %v1735, %v1735
        %v2548 = vpack.c.bf16 %v1736, %v1736
        %v2549 = vpack.c.bf16 %v1737, %v1737
        %v2550 = vpack.c.bf16 %v1738, %v1738
        %v2551 = vpack.c.bf16 %v2534, %v2534
        %v2554 = vunpack.c.l.b16 %v2541
        %v2555 = vunpack.c.l.b16 %v2542
        %v2556 = vpack.c.b16 %v2555, %v2554
        %v2559 = vsel %vm871, %v2551, 0
        %2561 = vmatprep.subr.bf16.mxu0 0
        %2562 = vmatpush1.bf16.msra.mxu0 %v2556
        %2563 = vmatprep.subr.bf16.mxu0 0
        %2564 = vmatpush1.bf16.msra.mxu0 0
        %2565 = vmatprep.subr.bf16.mxu0 0
        %2566 = vmatpush1.bf16.msra.mxu0 0
        %2567 = vmatprep.subr.bf16.mxu0 0
        %2568 = vmatpush1.bf16.msra.mxu0 0
        %2569 = vmatprep.subr.bf16.mxu0 0
        %2570 = vmatpush1.bf16.msra.mxu0 0
        %2571 = vmatprep.subr.bf16.mxu0 0
        %2572 = vmatpush1.bf16.msra.mxu0 0
        %2573 = vmatprep.subr.bf16.mxu0 0
        %2574 = vmatpush1.bf16.msra.mxu0 0
        %2575 = vmatprep.subr.bf16.mxu0 0
        %2576 = vmatpush1.bf16.msra.mxu0 0
        %2577 = vmatprep.subr.bf16.mxu0 0
        %2578 = vmatpush1.bf16.msra.mxu0 0
        %2579 = vmatprep.subr.bf16.mxu0 0
        %2580 = vmatpush1.bf16.msra.mxu0 0
        %2581 = vmatprep.subr.bf16.mxu0 0
        %2582 = vmatpush1.bf16.msra.mxu0 0
        %2583 = vmatprep.subr.bf16.mxu0 0
        %2584 = vmatpush1.bf16.msra.mxu0 0
        %2585 = vmatprep.subr.bf16.mxu0 0
        %2586 = vmatpush1.bf16.msra.mxu0 0
        %2587 = vmatprep.subr.bf16.mxu0 0
        %2588 = vmatpush1.bf16.msra.mxu0 0
        %2589 = vmatprep.subr.bf16.mxu0 0
        %2590 = vmatpush1.bf16.msra.mxu0 0
        %2591 = vmatprep.subr.bf16.mxu0 0
        %2592 = vmatpush1.bf16.msra.mxu0 0
        %2593 = vmatprep.mubr.bf16.mxu0 0
        %2594 = vmatmul.mubr.bf16.gmra.mrb[0].mxu0 %v2559
        %v2595 = vpop.f32.mrb[0].mxu0
        %v2596 = vadd.f32 0.0, %v2595
        %v2597 = vpop.f32.mrb[0].mxu0
        %v2598 = vpop.f32.mrb[0].mxu0
        %v2599 = vpop.f32.mrb[0].mxu0
        %2600 = vdwg.mxu0
        %v2609 = vunpack.c.l.b16 %v2543
        %v2610 = vunpack.c.l.b16 %v2544
        %v2611 = vunpack.c.l.b16 %v2545
        %v2612 = vunpack.c.l.b16 %v2546
        %v2613 = vunpack.c.l.b16 %v2547
        %v2614 = vunpack.c.l.b16 %v2548
        %v2615 = vunpack.c.l.b16 %v2549
        %v2616 = vunpack.c.l.b16 %v2550
        %v2617 = vrot.slane %v2610, 7
        %v2618 = vsel %vm2459, %v2617, %v2609
        %v2619 = vrot.slane %v2611, 6
        %v2620 = vsel %vm2461, %v2619, %v2618
        %v2621 = vrot.slane %v2612, 5
        %v2622 = vsel %vm2463, %v2621, %v2620
        %v2623 = vrot.slane %v2613, 4
        %v2624 = vsel %vm2465, %v2623, %v2622
        %v2625 = vrot.slane %v2614, 3
        %v2626 = vsel %vm2467, %v2625, %v2624
        %v2627 = vrot.slane %v2615, 2
        %v2628 = vsel %vm2469, %v2627, %v2626
        %v2629 = vrot.slane %v2616, 1
        %v2630 = vsel %vm2471, %v2629, %v2628
        %v2631 = vpack.c.b16 %v2630, %v2630
        %v2634 = vunpack.c.l.b16 %v2539
        %v2635 = vunpack.c.l.b16 %v2540
        %v2636 = vpack.c.b16 %v2635, %v2634
        %v2639 = vsel %vm871, %v2631, 0
        %2641 = vmatprep.subr.bf16.mxu0 0
        %2642 = vmatpush1.bf16.msra.mxu0 %v2636
        %2643 = vmatprep.subr.bf16.mxu0 0
        %2644 = vmatpush1.bf16.msra.mxu0 0
        %2645 = vmatprep.subr.bf16.mxu0 0
        %2646 = vmatpush1.bf16.msra.mxu0 0
        %2647 = vmatprep.subr.bf16.mxu0 0
        %2648 = vmatpush1.bf16.msra.mxu0 0
        %2649 = vmatprep.subr.bf16.mxu0 0
        %2650 = vmatpush1.bf16.msra.mxu0 0
        %2651 = vmatprep.subr.bf16.mxu0 0
        %2652 = vmatpush1.bf16.msra.mxu0 0
        %2653 = vmatprep.subr.bf16.mxu0 0
        %2654 = vmatpush1.bf16.msra.mxu0 0
        %2655 = vmatprep.subr.bf16.mxu0 0
        %2656 = vmatpush1.bf16.msra.mxu0 0
        %2657 = vmatprep.subr.bf16.mxu0 0
        %2658 = vmatpush1.bf16.msra.mxu0 0
        %2659 = vmatprep.subr.bf16.mxu0 0
        %2660 = vmatpush1.bf16.msra.mxu0 0
        %2661 = vmatprep.subr.bf16.mxu0 0
        %2662 = vmatpush1.bf16.msra.mxu0 0
        %2663 = vmatprep.subr.bf16.mxu0 0
        %2664 = vmatpush1.bf16.msra.mxu0 0
        %2665 = vmatprep.subr.bf16.mxu0 0
        %2666 = vmatpush1.bf16.msra.mxu0 0
        %2667 = vmatprep.subr.bf16.mxu0 0
        %2668 = vmatpush1.bf16.msra.mxu0 0
        %2669 = vmatprep.subr.bf16.mxu0 0
        %2670 = vmatpush1.bf16.msra.mxu0 0
        %2671 = vmatprep.subr.bf16.mxu0 0
        %2672 = vmatpush1.bf16.msra.mxu0 0
        %2673 = vmatprep.mubr.bf16.mxu0 0
        %2674 = vmatmul.mubr.bf16.gmra.mrb[0].mxu0 %v2639
        %v2675 = vpop.f32.mrb[0].mxu0
        %v2676 = vadd.f32 %v2596, %v2675
        %v2677 = vpop.f32.mrb[0].mxu0
        %v2678 = vpop.f32.mrb[0].mxu0
        %v2679 = vpop.f32.mrb[0].mxu0
        %2680 = vdwg.mxu0
        %v2681 = vlaneseq
        %v2682 = vshrl.u32 %v2681, 7
        %v2683 = vsub.s32 1, %v2682
        %v2684 = vrot.slane %v796, %v2683
        %v2685 = vadd.f32 %v2676, %v2684
        %v2686 = vxor.u32 %v2685, 2147483648
        %v2687 = vmul.f32 %v2686, 1.442695
        %v2688 = vpow.pop %v2687
        %v2689 = vadd.f32 %v2688, 1.0
        %v2690 = vrcp.pop %v2689
        %v2691 = vmul.f32 1.0, %v2690
        %v2700 = vrot.slane %v1732, 7
        %v2701 = vsel %vm2459, %v2700, %v1731
        %v2702 = vrot.slane %v1733, 6
        %v2703 = vsel %vm2461, %v2702, %v2701
        %v2704 = vrot.slane %v1734, 5
        %v2705 = vsel %vm2463, %v2704, %v2703
        %v2706 = vrot.slane %v1735, 4
        %v2707 = vsel %vm2465, %v2706, %v2705
        %v2708 = vrot.slane %v1736, 3
        %v2709 = vsel %vm2467, %v2708, %v2707
        %v2710 = vrot.slane %v1737, 2
        %v2711 = vsel %vm2469, %v2710, %v2709
        %v2712 = vrot.slane %v1738, 1
        %v2713 = vsel %vm2471, %v2712, %v2711
        %v2715 = vmul.f32 %v2691, %v2713
        %v2716 = vsub.f32 1.0, %v2691
        %v2717 = vmul.f32 %v2716, %v2534
        %v2718 = vadd.f32 %v2715, %v2717
        %2719 = vst.msk [vmem:[%s456] sm:$0xff] %vm871, %v2718
        %s2720 = sand.u32 %s282, 1
        %s2721 = scalar_lea.sflag [#allocation4], %s2720
        %s2722 = sand.u32 %s282, 1
        %s2723 = smul.addr %s2722, 8
        %s2724 = scalar_lea.vmem [#allocation3], %s2723
        %s2725 = smul.u32 16, %s31
        %p2726 = scmp.lt.s32.totalorder %s30, 1
        %s2727 = scalar_select %p2726, %s30, 1
        %p2728 = scmp.lt.s32.totalorder %s2725, 31
        %s2729 = scalar_select %p2728, %s2725, 31
        %s2730 = smul.addr %s2727, 32
        %s2731 = sadd.s32 %s2729, %s2730
        %s2732 = smul.addr %s2731, 8
        %s2733 = scalar_lea.vmem %s11, %s2732
        // Predicated region
        $region65: #{tpu_custom_call.1} parent=59 // pred_check
          %p2734 = pneg %p292
        $region66: #{tpu_custom_call.1} parent=59 // pred_check_branch
          %2736 = sbr.rel (%p2734) target = $region68
        $region67: #{tpu_custom_call.1} parent=59 // pred_region
          %s2738 = ssub.s32 128, 128
          %2739 = vsyncadd %s2721, %s2738
          %s2740 = smul.addr %s30, 2
          %s2741 = sadd.s32 %s31, %s2740
          %s2742 = smul.addr %s2741, 128
          %s2743 = scalar_lea.hbm %s10, %s2742
          %s2745 = sshll.u32 %s2724, 4
          %s2746 = int_to_ptr.vmem [resolvable:$true] %s2745
          %2748 = dma.vmem_to_hbm [thread:$0]  %s2746, 128, %s2743, %s2721
        $region68: #{tpu_custom_call.1} parent=59 // pred_fallthru
          _
        // Predicated region
        $region69: #{tpu_custom_call.1} parent=59 // pred_check
          %p2749 = pneg %p320
        $region70: #{tpu_custom_call.1} parent=59 // pred_check_branch
          %2751 = sbr.rel (%p2749) target = $region72
        $region71: #{tpu_custom_call.1} parent=59 // pred_region
          %s2752 = smul.u32 16, %s31
        $region72: #{tpu_custom_call.1} parent=59 // pred_fallthru
          _
      $region60: #{tpu_custom_call.1} parent=5 // pred_fallthru
        _
      %p2753 = scmp.le.s32.totalorder 2, %s21
      // Predicated region
      $region73: #{tpu_custom_call.1} parent=5 // pred_check
        %p2754 = pneg %p2753
      $region74: #{tpu_custom_call.1} parent=5 // pred_check_branch
        %2756 = sbr.rel (%p2754) target = $region76
      $region75: #{tpu_custom_call.1} parent=5 // pred_region
        %s2757 = ssub.s32 %s21, 2
        // Predicated region
        $region77: #{tpu_custom_call.1} parent=75 // pred_check
          %p2758 = pneg %p298
        $region78: #{tpu_custom_call.1} parent=75 // pred_check_branch
          %2760 = sbr.rel (%p2758) target = $region80
        $region79: #{tpu_custom_call.1} parent=75 // pred_region
          %s2761 = sand.u32 %s283, 1
          %s2762 = scalar_lea.sflag [#allocation4], %s2761
          %s2763 = sand.u32 %s283, 1
          %s2764 = smul.addr %s2763, 8
          %s2765 = scalar_lea.vmem [#allocation3], %s2764
          %2766 = dma.done %s2762, 128
        $region80: #{tpu_custom_call.1} parent=75 // pred_fallthru
          _
        // Predicated region
        $region81: #{tpu_custom_call.1} parent=75 // pred_check
          %p2767 = pneg %p326
        $region82: #{tpu_custom_call.1} parent=75 // pred_check_branch
          %2769 = sbr.rel (%p2767) target = $region84
        $region83: #{tpu_custom_call.1} parent=75 // pred_region
          %s2770 = smul.u32 16, %s33
          %p2771 = scmp.lt.s32.totalorder %s32, 1
          %s2772 = scalar_select %p2771, %s32, 1
          %p2773 = scmp.lt.s32.totalorder %s2770, 31
          %s2774 = scalar_select %p2773, %s2770, 31
          %s2775 = smul.addr %s2772, 32
          %s2776 = sadd.s32 %s2774, %s2775
          %s2777 = smul.addr %s2776, 8
          %s2778 = scalar_lea.vmem %s11, %s2777
        $region84: #{tpu_custom_call.1} parent=75 // pred_fallthru
          _
      $region76: #{tpu_custom_call.1} parent=5 // pred_fallthru
        _
    $region6: #{tpu_custom_call.1} parent=1 // loop_footer
      %s25 = sadd.s32 1, %s21
    $region7: #{tpu_custom_call.1} parent=1 // loop_footer_branch
      %20 = sbr.rel target = $region3
    $region8: #{tpu_custom_call.1} parent=1 // loop_exit
      _
    %2779 = vsyncpa [#allocation4], 1
    %s2780 = scalar_lea.sflag [#allocation4], 1
    %2781 = vsyncpa %s2780, 1

</llo_original>
